<compile_context>
chip_gen: v7x
topology: tpu7x:2x2x1
jax: 0.10.0
libtpu: 0.0.40
codegen_flags: <defaults>
</compile_context>

<pallas_src>
import math

import jax
import jax.numpy as jnp
from jax import lax
from jax.experimental import pallas as pl
from jax.experimental.pallas import tpu as pltpu

D_IN = 768        # fusion / embedding dim
D_HID = 256       # fc1 output dim
D_OUT = 13        # number of classes
D_OUT_PAD = 128   # lane-dense padded classifier width
BN_EPS = 1e-5
NORM_EPS = 1e-12  # torch.nn.functional.normalize default eps

DEFAULT_BLOCK_B = 512  # batch tile (bf16 inputs; fits 32 MiB scoped VMEM easily)


def _round_up(x, m):
    return ((x + m - 1) // m) * m


def _fusion_kernel(img_ref, txt_ref, w_t_ref, fused_w_ref, fused_b_ref, out_ref):
    # ---- load bf16 embedding tiles, upcast for the reductions ----
    x1 = img_ref[...].astype(jnp.float32)                              # (TB, 768)
    x2 = txt_ref[...].astype(jnp.float32)                              # (TB, 768)

    # 1/max(||x||, eps) == rsqrt(max(sum(x^2), eps^2))  (EUP rsqrt)
    inv1 = lax.rsqrt(jnp.maximum(jnp.sum(x1 * x1, axis=1, keepdims=True),
                                 NORM_EPS * NORM_EPS))
    inv2 = lax.rsqrt(jnp.maximum(jnp.sum(x2 * x2, axis=1, keepdims=True),
                                 NORM_EPS * NORM_EPS))

    # relu(x1*inv1) * relu(x2*inv2) == relu(x1) * relu(x2) * (inv1*inv2), inv > 0
    p = jnp.maximum(x1, 0.0) * jnp.maximum(x2, 0.0)
    xvt = (p * (inv1 * inv2)).astype(jnp.bfloat16)                     # (TB, 768)

    # ---- Xvt @ W.T (MXU, bf16 in / f32 acc) + ReLU ----
    h = jnp.dot(xvt, w_t_ref[...], preferred_element_type=jnp.float32)
    h = jnp.maximum(h, 0.0).astype(jnp.bfloat16)                       # (TB, 768)

    # ---- fc1 + BN(eval) + dropout(eval=id) + classifier folded into ONE dot ----
    y = jnp.dot(h, fused_w_ref[...], preferred_element_type=jnp.float32)
    out_ref[...] = (y + fused_b_ref[...]).astype(out_ref.dtype)        # (TB, 128)


def prepare_params(params):
    """One-time parameter prep: fold BN + fc1 + classifier, transpose, cast, pad."""
    inv_std = 1.0 / jnp.sqrt(params["bn_var"] + BN_EPS)
    bn_scale = params["bn_gamma"] * inv_std                        # (256,)
    bn_shift = params["bn_beta"] - params["bn_mean"] * bn_scale    # (256,)

    w_t = params["W"].T.astype(jnp.bfloat16)                       # (768, 768) bf16

    # fc1(+BN, eval) followed by classifier with no intervening nonlinearity:
    #   y = h @ (fc1.W.T * bn_scale) @ cls.W.T + ((fc1.b*bn_scale + bn_shift) @ cls.W.T + cls.b)
    fc1w_bn_t = params["fc1_w"].T * bn_scale[None, :]              # (768, 256) f32
    fc1b_bn = params["fc1_b"] * bn_scale + bn_shift                # (256,)
    fused_w = fc1w_bn_t @ params["cls_w"].T                        # (768, 13)  f32
    fused_b = fc1b_bn @ params["cls_w"].T + params["cls_b"]        # (13,)

    fused_w_pad = jnp.zeros((D_IN, D_OUT_PAD), jnp.float32)
    fused_w_pad = fused_w_pad.at[:, :D_OUT].set(fused_w).astype(jnp.bfloat16)
    fused_b_pad = jnp.zeros((1, D_OUT_PAD), jnp.float32)
    fused_b_pad = fused_b_pad.at[0, :D_OUT].set(fused_b)

    return {"w_t": w_t, "fused_w": fused_w_pad, "fused_b": fused_b_pad}


def easy_vqa_early_fusion(image_emb, text_emb, prepared, *, block_b=DEFAULT_BLOCK_B):
    """Fused forward pass. image_emb/text_emb: (B, 768) float32."""
    B = image_emb.shape[0]

    # bf16 inputs: halves input HBM traffic and the double-buffer VMEM footprint.
    image_emb = image_emb.astype(jnp.bfloat16)
    text_emb = text_emb.astype(jnp.bfloat16)

    # Batch tile: capped at ceil(B/2) (rounded to 8 sublanes) so that whenever B
    # allows it we get >= 2 grid steps and the "parallel" axis shards across both
    # TensorCores on v7x; otherwise a single small tile (no padding waste).
    tb = max(8, min(block_b, _round_up(-(-B // 2), 8)))
    b_pad = _round_up(B, tb)
    if b_pad != B:
        pad = ((0, b_pad - B), (0, 0))
        image_emb = jnp.pad(image_emb, pad)
        text_emb = jnp.pad(text_emb, pad)
    num_tiles = b_pad // tb

    flops = 2 * b_pad * (D_IN * D_IN + D_IN * D_OUT_PAD)
    bytes_accessed = (
        2 * b_pad * D_IN * 2                 # two input slabs (bf16)
        + b_pad * D_OUT_PAD * 4              # output slab (f32)
        + D_IN * D_IN * 2                    # W.T (bf16, resident)
        + D_IN * D_OUT_PAD * 2               # fused fc1+BN+classifier weights (bf16)
        + D_OUT_PAD * 4)                     # fused bias (f32)
    cost = pl.CostEstimate(flops=flops, transcendentals=2 * b_pad,
                           bytes_accessed=bytes_accessed)

    out = pl.pallas_call(
        _fusion_kernel,
        out_shape=jax.ShapeDtypeStruct((b_pad, D_OUT_PAD), jnp.float32),
        grid=(num_tiles,),
        in_specs=[
            pl.BlockSpec((tb, D_IN), lambda i: (i, 0)),            # image tile (bf16)
            pl.BlockSpec((tb, D_IN), lambda i: (i, 0)),            # text tile  (bf16)
            pl.BlockSpec((D_IN, D_IN), lambda i: (0, 0)),          # W.T (resident)
            pl.BlockSpec((D_IN, D_OUT_PAD), lambda i: (0, 0)),     # fused weights
            pl.BlockSpec((1, D_OUT_PAD), lambda i: (0, 0)),        # fused bias
        ],
        out_specs=pl.BlockSpec((tb, D_OUT_PAD), lambda i: (i, 0)),
        compiler_params=pltpu.CompilerParams(
            dimension_semantics=("parallel",),
            vmem_limit_bytes=32 * 1024 * 1024),
        cost_estimate=cost,
    )(image_emb, text_emb, prepared["w_t"], prepared["fused_w"],
      prepared["fused_b"])

    return out[:B, :D_OUT]


def init_params(key):
    """Deterministic parameter init matching the PyTorch module's shapes."""
    k_w, k_fc1w, k_fc1b, k_clsw, k_clsb = jax.random.split(key, 5)

    # nn.init.kaiming_uniform_(W, a=sqrt(5)) on a (768, 768) tensor
    a = math.sqrt(5.0)
    bound_w = math.sqrt(6.0 / ((1.0 + a * a) * D_IN))
    W = jax.random.uniform(k_w, (D_IN, D_IN), jnp.float32, -bound_w, bound_w)

    # nn.Linear default init: kaiming_uniform(a=sqrt(5)) weights, uniform bias
    bound_fc1 = 1.0 / math.sqrt(D_IN)
    fc1_w = jax.random.uniform(k_fc1w, (D_HID, D_IN), jnp.float32,
                               -bound_fc1, bound_fc1)
    fc1_b = jax.random.uniform(k_fc1b, (D_HID,), jnp.float32,
                               -bound_fc1, bound_fc1)

    bound_cls = 1.0 / math.sqrt(D_HID)
    cls_w = jax.random.uniform(k_clsw, (D_OUT, D_HID), jnp.float32,
                               -bound_cls, bound_cls)
    cls_b = jax.random.uniform(k_clsb, (D_OUT,), jnp.float32,
                               -bound_cls, bound_cls)

    return {
        "W": W,
        "fc1_w": fc1_w, "fc1_b": fc1_b,
        "bn_gamma": jnp.ones((D_HID,), jnp.float32),
        "bn_beta": jnp.zeros((D_HID,), jnp.float32),
        "bn_mean": jnp.zeros((D_HID,), jnp.float32),
        "bn_var": jnp.ones((D_HID,), jnp.float32),
        "cls_w": cls_w, "cls_b": cls_b,
    }


def _l2n(x):
    inv = lax.rsqrt(jnp.maximum(jnp.sum(x * x, axis=1, keepdims=True),
                                NORM_EPS * NORM_EPS))
    return x * inv


def _reference_matched(image_emb, text_emb, prepared):
    """Pure-JAX reference with the same bf16/folded-weight precision as the kernel."""
    x1 = image_emb.astype(jnp.bfloat16).astype(jnp.float32)
    x2 = text_emb.astype(jnp.bfloat16).astype(jnp.float32)
    inv1 = lax.rsqrt(jnp.maximum(jnp.sum(x1 * x1, axis=1, keepdims=True),
                                 NORM_EPS * NORM_EPS))
    inv2 = lax.rsqrt(jnp.maximum(jnp.sum(x2 * x2, axis=1, keepdims=True),
                                 NORM_EPS * NORM_EPS))
    xvt = (jnp.maximum(x1, 0.0) * jnp.maximum(x2, 0.0)
           * (inv1 * inv2)).astype(jnp.bfloat16)
    h = jnp.dot(xvt, prepared["w_t"], preferred_element_type=jnp.float32)
    h = jnp.maximum(h, 0.0).astype(jnp.bfloat16)
    y = jnp.dot(h, prepared["fused_w"], preferred_element_type=jnp.float32)
    return (y + prepared["fused_b"])[:, :D_OUT]


def _reference_f32(image_emb, text_emb, params):
    """Full-precision pure-JAX reference of the eval-mode forward pass."""
    xv = jnp.maximum(_l2n(image_emb), 0.0)
    xt = jnp.maximum(_l2n(text_emb), 0.0)
    h = jnp.maximum((xv * xt) @ params["W"].T, 0.0)
    h = h @ params["fc1_w"].T + params["fc1_b"]
    h = (h - params["bn_mean"]) / jnp.sqrt(params["bn_var"] + BN_EPS)
    h = h * params["bn_gamma"] + params["bn_beta"]
    return h @ params["cls_w"].T + params["cls_b"]


if __name__ == "__main__":
    key = jax.random.PRNGKey(0)
    k_params, k_img, k_txt = jax.random.split(key, 3)

    B = 8
    params = init_params(k_params)
    prepared = prepare_params(params)

    image_emb = jax.random.normal(k_img, (B, D_IN), jnp.float32)
    text_emb = jax.random.normal(k_txt, (B, D_IN), jnp.float32)

    out = easy_vqa_early_fusion(image_emb, text_emb, prepared)
    out = jax.block_until_ready(out)
    assert out.shape == (B, D_OUT), out.shape

    # Precision-matched (bf16 inputs/weights, folded fc1+BN+classifier) reference.
    ref_m = _reference_matched(image_emb, text_emb, prepared)
    assert jnp.allclose(out, ref_m, atol=1e-4, rtol=1e-3), (
        float(jnp.max(jnp.abs(out - ref_m))))

    # Full f32 reference: looser tolerance (bf16 input/weight casts).
    ref_f32 = _reference_f32(image_emb, text_emb, params)
    assert jnp.allclose(out, ref_f32, atol=5e-2, rtol=5e-2), (
        float(jnp.max(jnp.abs(out - ref_f32))))

    print("KERNEL_OK")
</pallas_src>

<mosaic_0001>
module attributes {stable_mosaic.version = 11 : i64} {
  func.func @_fusion_kernel(%arg0: i32, %arg1: memref<8x768xbf16, #tpu.memory_space<vmem>>, %arg2: memref<8x768xbf16, #tpu.memory_space<vmem>>, %arg3: memref<768x768xbf16, #tpu.memory_space<vmem>>, %arg4: memref<768x128xbf16, #tpu.memory_space<vmem>>, %arg5: memref<1x128xf32, #tpu.memory_space<vmem>>, %arg6: memref<8x128xf32, #tpu.memory_space<vmem>>) attributes {dimension_semantics = [#tpu.dimension_semantics<parallel>], iteration_bounds = array<i64: 1>, scalar_prefetch = 0 : i64, scratch_operands = 0 : i64, tpu.core_type = #tpu.core_type<tc>, window_params = [{transform_indices = @transform_0, window_bounds = array<i64: 8, 768>}, {transform_indices = @transform_1, window_bounds = array<i64: 8, 768>}, {pipeline_mode = #tpu.pipeline_mode<synchronous>, transform_indices = @transform_2, window_bounds = array<i64: 768, 768>}, {pipeline_mode = #tpu.pipeline_mode<synchronous>, transform_indices = @transform_3, window_bounds = array<i64: 768, 128>}, {pipeline_mode = #tpu.pipeline_mode<synchronous>, transform_indices = @transform_4, window_bounds = array<i64: 1, 128>}, {transform_indices = @transform_5, window_bounds = array<i64: 8, 128>}]} {
    %c0 = arith.constant 0 : index
    %c0_0 = arith.constant 0 : index
    %0 = vector.load %arg1[%c0, %c0_0] : memref<8x768xbf16, #tpu.memory_space<vmem>>, vector<8x768xbf16>
    %1 = arith.extf %0 : vector<8x768xbf16> to vector<8x768xf32>
    %c0_1 = arith.constant 0 : index
    %c0_2 = arith.constant 0 : index
    %2 = vector.load %arg2[%c0_1, %c0_2] : memref<8x768xbf16, #tpu.memory_space<vmem>>, vector<8x768xbf16>
    %3 = arith.extf %2 : vector<8x768xbf16> to vector<8x768xf32>
    %4 = arith.mulf %1, %1 : vector<8x768xf32>
    %cst = arith.constant dense<0.000000e+00> : vector<8xf32>
    %5 = vector.multi_reduction <add>, %4, %cst [1] : vector<8x768xf32> to vector<8xf32>
    %6 = vector.shape_cast %5 : vector<8xf32> to vector<8x1xf32>
    %cst_3 = arith.constant 1.000000e-24 : f32
    %7 = vector.broadcast %cst_3 : f32 to vector<8x1xf32>
    %8 = arith.maximumf %6, %7 : vector<8x1xf32>
    %9 = math.rsqrt %8 : vector<8x1xf32>
    %10 = arith.mulf %3, %3 : vector<8x768xf32>
    %cst_4 = arith.constant dense<0.000000e+00> : vector<8xf32>
    %11 = vector.multi_reduction <add>, %10, %cst_4 [1] : vector<8x768xf32> to vector<8xf32>
    %12 = vector.shape_cast %11 : vector<8xf32> to vector<8x1xf32>
    %cst_5 = arith.constant 1.000000e-24 : f32
    %13 = vector.broadcast %cst_5 : f32 to vector<8x1xf32>
    %14 = arith.maximumf %12, %13 : vector<8x1xf32>
    %15 = math.rsqrt %14 : vector<8x1xf32>
    %cst_6 = arith.constant 0.000000e+00 : f32
    %16 = vector.broadcast %cst_6 : f32 to vector<8x768xf32>
    %17 = arith.maximumf %1, %16 : vector<8x768xf32>
    %cst_7 = arith.constant 0.000000e+00 : f32
    %18 = vector.broadcast %cst_7 : f32 to vector<8x768xf32>
    %19 = arith.maximumf %3, %18 : vector<8x768xf32>
    %20 = arith.mulf %17, %19 : vector<8x768xf32>
    %21 = arith.mulf %9, %15 : vector<8x1xf32>
    %22 = vector.broadcast %21 : vector<8x1xf32> to vector<8x768xf32>
    %23 = arith.mulf %20, %22 : vector<8x768xf32>
    %24 = arith.truncf %23 : vector<8x768xf32> to vector<8x768xbf16>
    %c0_8 = arith.constant 0 : index
    %c0_9 = arith.constant 0 : index
    %25 = vector.load %arg3[%c0_8, %c0_9] : memref<768x768xbf16, #tpu.memory_space<vmem>>, vector<768x768xbf16>
    %cst_10 = arith.constant dense<0.000000e+00> : vector<8x768xf32>
    %26 = tpu.matmul %24, %25, %cst_10 {dimension_numbers = #tpu.dot_dimension_numbers<[1], [0], [0], [1], [0, 0, 1, 1], [], []>} : vector<8x768xbf16>, vector<768x768xbf16>, vector<8x768xf32> -> vector<8x768xf32>
    %cst_11 = arith.constant 0.000000e+00 : f32
    %27 = vector.broadcast %cst_11 : f32 to vector<8x768xf32>
    %28 = arith.maximumf %26, %27 : vector<8x768xf32>
    %29 = arith.truncf %28 : vector<8x768xf32> to vector<8x768xbf16>
    %c0_12 = arith.constant 0 : index
    %c0_13 = arith.constant 0 : index
    %30 = vector.load %arg4[%c0_12, %c0_13] : memref<768x128xbf16, #tpu.memory_space<vmem>>, vector<768x128xbf16>
    %cst_14 = arith.constant dense<0.000000e+00> : vector<8x128xf32>
    %31 = tpu.matmul %29, %30, %cst_14 {dimension_numbers = #tpu.dot_dimension_numbers<[1], [0], [0], [1], [0, 0, 1, 1], [], []>} : vector<8x768xbf16>, vector<768x128xbf16>, vector<8x128xf32> -> vector<8x128xf32>
    %c0_15 = arith.constant 0 : index
    %c0_16 = arith.constant 0 : index
    %32 = vector.load %arg5[%c0_15, %c0_16] : memref<1x128xf32, #tpu.memory_space<vmem>>, vector<1x128xf32>
    %33 = vector.broadcast %32 : vector<1x128xf32> to vector<8x128xf32>
    %34 = arith.addf %31, %33 : vector<8x128xf32>
    %c0_17 = arith.constant 0 : index
    %c0_18 = arith.constant 0 : index
    %35 = vector.load %arg6[%c0_17, %c0_18] : memref<8x128xf32, #tpu.memory_space<vmem>>, vector<8x128xf32>
    tpu.vector_store %arg6[%c0_17, %c0_18], %34 {strides = array<i32>} : memref<8x128xf32, #tpu.memory_space<vmem>>, vector<8x128xf32>,
    return
  }
  func.func @transform_0(%arg0: i32) -> (i32, i32) {
    %c0_i32 = arith.constant 0 : i32
    %c0_i32_0 = arith.constant 0 : i32
    return %arg0, %c0_i32 : i32, i32
  }
  func.func @transform_1(%arg0: i32) -> (i32, i32) {
    %c0_i32 = arith.constant 0 : i32
    %c0_i32_0 = arith.constant 0 : i32
    return %arg0, %c0_i32 : i32, i32
  }
  func.func @transform_2(%arg0: i32) -> (i32, i32) {
    %c0_i32 = arith.constant 0 : i32
    %c0_i32_0 = arith.constant 0 : i32
    %c0_i32_1 = arith.constant 0 : i32
    return %c0_i32, %c0_i32_0 : i32, i32
  }
  func.func @transform_3(%arg0: i32) -> (i32, i32) {
    %c0_i32 = arith.constant 0 : i32
    %c0_i32_0 = arith.constant 0 : i32
    %c0_i32_1 = arith.constant 0 : i32
    return %c0_i32, %c0_i32_0 : i32, i32
  }
  func.func @transform_4(%arg0: i32) -> (i32, i32) {
    %c0_i32 = arith.constant 0 : i32
    %c0_i32_0 = arith.constant 0 : i32
    %c0_i32_1 = arith.constant 0 : i32
    return %c0_i32, %c0_i32_0 : i32, i32
  }
  func.func @transform_5(%arg0: i32) -> (i32, i32) {
    %c0_i32 = arith.constant 0 : i32
    %c0_i32_0 = arith.constant 0 : i32
    return %arg0, %c0_i32 : i32, i32
  }
}

</mosaic_0001>

<llo_original>
// kernel: tpu_custom_call.1
$region0: #{tpu_custom_call.1}
  #allocation0 [shape = 'u32[]', space=smem, size = 0x4, offset = 0x4, fixed_abs, tag = 'smem constant byte address 0x4 - core index']
  #allocation1 [shape = 'u32[144,128]{1,0:T(1,128)}', space=vmem, size = 0x12000, scoped, tag = 'internal scratch']
  %s0 = inlined_call_operand.hbm [shape: bf16[8,768], index: 0, kind: input, shape index: {}]
  %s1 = inlined_call_operand.hbm [shape: bf16[8,768], index: 1, kind: input, shape index: {}]
  %s2 = inlined_call_operand.hbm [shape: bf16[768,768], index: 2, kind: input, shape index: {}]
  %s3 = inlined_call_operand.hbm [shape: bf16[768,128], index: 3, kind: input, shape index: {}]
  %s4 = inlined_call_operand.hbm [shape: f32[1,128], index: 4, kind: input, shape index: {}]
  %s5 = inlined_call_operand.hbm [shape: f32[8,128], index: 5, kind: output, shape index: {}]
  %s6 = sld [smem:[#allocation0]]
  $region50: #{tpu_custom_call.1} parent=0
    _
  %s8 = ssub.s32 1, %s6
  %s9 = scalar_select 0, %s8, %s6
  $region1: #{tpu_custom_call.1} parent=0
    #allocation2 [shape = 'u8[12288]{0}', space=vmem, size = 0x3000, scoped, tag = 'input window, operand 0, single buffered']
    #allocation3 [shape = 's32[1]{0}', space=sflag, size = 0x4, scoped, tag = 'scoped memory for tpu_custom_call.1']
    #allocation4 [shape = 's32[1]{0}', space=sflag, size = 0x4, scoped, tag = 'scoped memory for tpu_custom_call.1']
    #allocation5 [shape = 'u8[12288]{0}', space=vmem, size = 0x3000, scoped, tag = 'input window, operand 1, single buffered']
    #allocation6 [shape = 's32[1]{0}', space=sflag, size = 0x4, scoped, tag = 'scoped memory for tpu_custom_call.1']
    #allocation7 [shape = 'u8[1179648]{0}', space=vmem, size = 0x120000, scoped, tag = 'input window, operand 2, single buffered']
    #allocation8 [shape = 'u8[196608]{0}', space=vmem, size = 0x30000, scoped, tag = 'input window, operand 3, single buffered']
    #allocation9 [shape = 's32[1]{0}', space=sflag, size = 0x4, scoped, tag = 'scoped memory for tpu_custom_call.1']
    #allocation10 [shape = 'u8[512]{0}', space=vmem, size = 0x400, scoped, tag = 'input window, operand 4, single buffered']
    #allocation11 [shape = 'u8[4096]{0}', space=vmem, size = 0x1000, scoped, tag = 'output window, operand 0, single buffered']
    %10 = vsyncpa [#allocation3], 0
    %11 = vsyncpa [#allocation6], 0
    %12 = vsyncpa [#allocation9], 0
    %13 = vsyncpa [#allocation4], 0
    // Predicated region
    $region2: #{tpu_custom_call.1} parent=1 // pred_check
      _
    $region3: #{tpu_custom_call.1} parent=1 // pred_check_branch
      %15 = sbr.rel (0) target = $region5
    $region4: #{tpu_custom_call.1} parent=1 // pred_region
      %s17 = ssub.s32 384, 384
      %18 = vsyncadd [#allocation3], %s17
      %s20 = sshll.u32 [#allocation2], 4
      %s21 = int_to_ptr.vmem [resolvable:$true] %s20
      %23 = dma.hbm_to_vmem [thread:$0]  %s0, 384, %s21, [#allocation3]
    $region5: #{tpu_custom_call.1} parent=1 // pred_fallthru
      _
    // Predicated region
    $region6: #{tpu_custom_call.1} parent=1 // pred_check
      _
    $region7: #{tpu_custom_call.1} parent=1 // pred_check_branch
      %25 = sbr.rel (0) target = $region9
    $region8: #{tpu_custom_call.1} parent=1 // pred_region
      %s27 = ssub.s32 384, 384
      %28 = vsyncadd [#allocation6], %s27
      %s30 = sshll.u32 [#allocation5], 4
      %s31 = int_to_ptr.vmem [resolvable:$true] %s30
      %33 = dma.hbm_to_vmem [thread:$0]  %s1, 384, %s31, [#allocation6]
    $region9: #{tpu_custom_call.1} parent=1 // pred_fallthru
      _
    // Predicated region
    $region10: #{tpu_custom_call.1} parent=1 // pred_check
      _
    $region11: #{tpu_custom_call.1} parent=1 // pred_check_branch
      %35 = sbr.rel (0) target = $region13
    $region12: #{tpu_custom_call.1} parent=1 // pred_region
      %s37 = ssub.s32 36864, 36864
      %38 = vsyncadd [#allocation6], %s37
      %s39 = sshll.u32 [#allocation7], 4
      %s40 = int_to_ptr.vmem [resolvable:$true] %s39
      %45 = dma.hbm_to_vmem [thread:$0]  %s2, 36864, %s40, [#allocation6], 384, 384, 24
    $region13: #{tpu_custom_call.1} parent=1 // pred_fallthru
      _
    // Predicated region
    $region14: #{tpu_custom_call.1} parent=1 // pred_check
      _
    $region15: #{tpu_custom_call.1} parent=1 // pred_check_branch
      %47 = sbr.rel (0) target = $region17
    $region16: #{tpu_custom_call.1} parent=1 // pred_region
      %s49 = ssub.s32 6144, 6144
      %50 = vsyncadd [#allocation9], %s49
      %s51 = sshll.u32 [#allocation8], 4
      %s52 = int_to_ptr.vmem [resolvable:$true] %s51
      %57 = dma.hbm_to_vmem [thread:$0]  %s3, 6144, %s52, [#allocation9], 64, 64, 4
    $region17: #{tpu_custom_call.1} parent=1 // pred_fallthru
      _
    // Predicated region
    $region18: #{tpu_custom_call.1} parent=1 // pred_check
      _
    $region19: #{tpu_custom_call.1} parent=1 // pred_check_branch
      %59 = sbr.rel (0) target = $region21
    $region20: #{tpu_custom_call.1} parent=1 // pred_region
      %s61 = ssub.s32 16, 16
      %62 = vsyncadd [#allocation9], %s61
      %s64 = sshll.u32 [#allocation10], 4
      %s65 = int_to_ptr.vmem [resolvable:$true] %s64
      %67 = dma.hbm_to_vmem [thread:$0]  %s4, 16, %s65, [#allocation9]
    $region21: #{tpu_custom_call.1} parent=1 // pred_fallthru
      _
    // Predicated region
    $region22: #{tpu_custom_call.1} parent=1 // pred_check
      _
    $region23: #{tpu_custom_call.1} parent=1 // pred_check_branch
      %69 = sbr.rel (0) target = $region25
    $region24: #{tpu_custom_call.1} parent=1 // pred_region
      %70 = dma.done [#allocation3], 384
    $region25: #{tpu_custom_call.1} parent=1 // pred_fallthru
      _
    // Predicated region
    $region26: #{tpu_custom_call.1} parent=1 // pred_check
      _
    $region27: #{tpu_custom_call.1} parent=1 // pred_check_branch
      %72 = sbr.rel (0) target = $region29
    $region28: #{tpu_custom_call.1} parent=1 // pred_region
      %73 = dma.done [#allocation6], 384
    $region29: #{tpu_custom_call.1} parent=1 // pred_fallthru
      _
    // Predicated region
    $region30: #{tpu_custom_call.1} parent=1 // pred_check
      _
    $region31: #{tpu_custom_call.1} parent=1 // pred_check_branch
      %75 = sbr.rel (0) target = $region33
    $region32: #{tpu_custom_call.1} parent=1 // pred_region
      %76 = dma.done [#allocation6], 36864
    $region33: #{tpu_custom_call.1} parent=1 // pred_fallthru
      _
    // Predicated region
    $region34: #{tpu_custom_call.1} parent=1 // pred_check
      _
    $region35: #{tpu_custom_call.1} parent=1 // pred_check_branch
      %78 = sbr.rel (0) target = $region37
    $region36: #{tpu_custom_call.1} parent=1 // pred_region
      %79 = dma.done [#allocation9], 6144
    $region37: #{tpu_custom_call.1} parent=1 // pred_fallthru
      _
    // Predicated region
    $region38: #{tpu_custom_call.1} parent=1 // pred_check
      _
    $region39: #{tpu_custom_call.1} parent=1 // pred_check_branch
      %81 = sbr.rel (0) target = $region41
    $region40: #{tpu_custom_call.1} parent=1 // pred_region
      %82 = dma.done [#allocation9], 16
    $region41: #{tpu_custom_call.1} parent=1 // pred_fallthru
      _
    %v84 = vld [vmem:[#allocation2] sm:$0xff]
    %v85 = vld [vmem:[#allocation2 + $0x8] sm:$0xff]
    %v86 = vld [vmem:[#allocation2 + $0x10] sm:$0xff]
    %v87 = vunpack.c.l.bf16 %v84
    %v88 = vunpack.c.h.bf16 %v84
    %v89 = vunpack.c.l.bf16 %v85
    %v90 = vunpack.c.h.bf16 %v85
    %v91 = vunpack.c.l.bf16 %v86
    %v92 = vunpack.c.h.bf16 %v86
    %v93 = vld [vmem:[#allocation5] sm:$0xff]
    %v94 = vld [vmem:[#allocation5 + $0x8] sm:$0xff]
    %v95 = vld [vmem:[#allocation5 + $0x10] sm:$0xff]
    %v96 = vunpack.c.l.bf16 %v93
    %v97 = vunpack.c.h.bf16 %v93
    %v98 = vunpack.c.l.bf16 %v94
    %v99 = vunpack.c.h.bf16 %v94
    %v100 = vunpack.c.l.bf16 %v95
    %v101 = vunpack.c.h.bf16 %v95
    %v102 = vmul.f32 %v87, %v87
    %v103 = vmul.f32 %v88, %v88
    %v104 = vmul.f32 %v89, %v89
    %v105 = vmul.f32 %v90, %v90
    %v106 = vmul.f32 %v91, %v91
    %v107 = vmul.f32 %v92, %v92
    %v108 = vadd.f32 %v102, %v103
    %v109 = vadd.f32 %v108, %v104
    %v110 = vadd.f32 %v109, %v105
    %v111 = vadd.f32 %v110, %v106
    %v112 = vadd.f32 %v111, %v107
    %113 = vadd.xlane.f32.xlu0 %v112
    %v114 = vpop.xlane.xlu0 %113
    %v115 = vmax.f32 %v114, 1e-24
    %v116 = vrsqrt.pop %v115
    %v117 = vmul.f32 %v96, %v96
    %v118 = vmul.f32 %v97, %v97
    %v119 = vmul.f32 %v98, %v98
    %v120 = vmul.f32 %v99, %v99
    %v121 = vmul.f32 %v100, %v100
    %v122 = vmul.f32 %v101, %v101
    %v123 = vadd.f32 %v117, %v118
    %v124 = vadd.f32 %v123, %v119
    %v125 = vadd.f32 %v124, %v120
    %v126 = vadd.f32 %v125, %v121
    %v127 = vadd.f32 %v126, %v122
    %128 = vadd.xlane.f32.xlu0 %v127
    %v129 = vpop.xlane.xlu0 %128
    %v130 = vmax.f32 %v129, 1e-24
    %v131 = vrsqrt.pop %v130
    %v132 = vmax.f32 %v87, 0.0
    %v133 = vmax.f32 %v88, 0.0
    %v134 = vmax.f32 %v89, 0.0
    %v135 = vmax.f32 %v90, 0.0
    %v136 = vmax.f32 %v91, 0.0
    %v137 = vmax.f32 %v92, 0.0
    %v138 = vmax.f32 %v96, 0.0
    %v139 = vmax.f32 %v97, 0.0
    %v140 = vmax.f32 %v98, 0.0
    %v141 = vmax.f32 %v99, 0.0
    %v142 = vmax.f32 %v100, 0.0
    %v143 = vmax.f32 %v101, 0.0
    %v144 = vmul.f32 %v132, %v138
    %v145 = vmul.f32 %v133, %v139
    %v146 = vmul.f32 %v134, %v140
    %v147 = vmul.f32 %v135, %v141
    %v148 = vmul.f32 %v136, %v142
    %v149 = vmul.f32 %v137, %v143
    %v150 = vmul.f32 %v116, %v131
    %v151 = vmul.f32 %v144, %v150
    %v152 = vmul.f32 %v145, %v150
    %v153 = vmul.f32 %v146, %v150
    %v154 = vmul.f32 %v147, %v150
    %v155 = vmul.f32 %v148, %v150
    %v156 = vmul.f32 %v149, %v150
    %v157 = vpack.c.bf16 %v151, %v151
    %v158 = vpack.c.bf16 %v152, %v152
    %v159 = vpack.c.bf16 %v153, %v153
    %v160 = vpack.c.bf16 %v154, %v154
    %v161 = vpack.c.bf16 %v155, %v155
    %v162 = vpack.c.bf16 %v156, %v156
    %v163 = vld [vmem:[#allocation7] sm:$0xff]
    %v164 = vld [vmem:[#allocation7 + $0x8] sm:$0xff]
    %v165 = vld [vmem:[#allocation7 + $0x10] sm:$0xff]
    %v166 = vld [vmem:[#allocation7 + $0x18] sm:$0xff]
    %v167 = vld [vmem:[#allocation7 + $0x20] sm:$0xff]
    %v168 = vld [vmem:[#allocation7 + $0x28] sm:$0xff]
    %v169 = vld [vmem:[#allocation7 + $0x30] sm:$0xff]
    %v170 = vld [vmem:[#allocation7 + $0x38] sm:$0xff]
    %v171 = vld [vmem:[#allocation7 + $0x40] sm:$0xff]
    %v172 = vld [vmem:[#allocation7 + $0x48] sm:$0xff]
    %v173 = vld [vmem:[#allocation7 + $0x50] sm:$0xff]
    %v174 = vld [vmem:[#allocation7 + $0x58] sm:$0xff]
    %v175 = vld [vmem:[#allocation7 + $0x60] sm:$0xff]
    %v176 = vld [vmem:[#allocation7 + $0x68] sm:$0xff]
    %v177 = vld [vmem:[#allocation7 + $0x70] sm:$0xff]
    %v178 = vld [vmem:[#allocation7 + $0x78] sm:$0xff]
    %v179 = vld [vmem:[#allocation7 + $0x80] sm:$0xff]
    %v180 = vld [vmem:[#allocation7 + $0x88] sm:$0xff]
    %v181 = vld [vmem:[#allocation7 + $0x90] sm:$0xff]
    %v182 = vld [vmem:[#allocation7 + $0x98] sm:$0xff]
    %v183 = vld [vmem:[#allocation7 + $0xa0] sm:$0xff]
    %v184 = vld [vmem:[#allocation7 + $0xa8] sm:$0xff]
    %v185 = vld [vmem:[#allocation7 + $0xb0] sm:$0xff]
    %v186 = vld [vmem:[#allocation7 + $0xb8] sm:$0xff]
    %v187 = vld [vmem:[#allocation7 + $0xc0] sm:$0xff]
    %v188 = vld [vmem:[#allocation7 + $0xc8] sm:$0xff]
    %v189 = vld [vmem:[#allocation7 + $0xd0] sm:$0xff]
    %v190 = vld [vmem:[#allocation7 + $0xd8] sm:$0xff]
    %v191 = vld [vmem:[#allocation7 + $0xe0] sm:$0xff]
    %v192 = vld [vmem:[#allocation7 + $0xe8] sm:$0xff]
    %v193 = vld [vmem:[#allocation7 + $0xf0] sm:$0xff]
    %v194 = vld [vmem:[#allocation7 + $0xf8] sm:$0xff]
    %v195 = vld [vmem:[#allocation7 + $0x100] sm:$0xff]
    %v196 = vld [vmem:[#allocation7 + $0x108] sm:$0xff]
    %v197 = vld [vmem:[#allocation7 + $0x110] sm:$0xff]
    %v198 = vld [vmem:[#allocation7 + $0x118] sm:$0xff]
    %v199 = vld [vmem:[#allocation7 + $0x120] sm:$0xff]
    %v200 = vld [vmem:[#allocation7 + $0x128] sm:$0xff]
    %v201 = vld [vmem:[#allocation7 + $0x130] sm:$0xff]
    %v202 = vld [vmem:[#allocation7 + $0x138] sm:$0xff]
    %v203 = vld [vmem:[#allocation7 + $0x140] sm:$0xff]
    %v204 = vld [vmem:[#allocation7 + $0x148] sm:$0xff]
    %v205 = vld [vmem:[#allocation7 + $0x150] sm:$0xff]
    %v206 = vld [vmem:[#allocation7 + $0x158] sm:$0xff]
    %v207 = vld [vmem:[#allocation7 + $0x160] sm:$0xff]
    %v208 = vld [vmem:[#allocation7 + $0x168] sm:$0xff]
    %v209 = vld [vmem:[#allocation7 + $0x170] sm:$0xff]
    %v210 = vld [vmem:[#allocation7 + $0x178] sm:$0xff]
    %v211 = vld [vmem:[#allocation7 + $0x180] sm:$0xff]
    %v212 = vld [vmem:[#allocation7 + $0x188] sm:$0xff]
    %v213 = vld [vmem:[#allocation7 + $0x190] sm:$0xff]
    %v214 = vld [vmem:[#allocation7 + $0x198] sm:$0xff]
    %v215 = vld [vmem:[#allocation7 + $0x1a0] sm:$0xff]
    %v216 = vld [vmem:[#allocation7 + $0x1a8] sm:$0xff]
    %v217 = vld [vmem:[#allocation7 + $0x1b0] sm:$0xff]
    %v218 = vld [vmem:[#allocation7 + $0x1b8] sm:$0xff]
    %v219 = vld [vmem:[#allocation7 + $0x1c0] sm:$0xff]
    %v220 = vld [vmem:[#allocation7 + $0x1c8] sm:$0xff]
    %v221 = vld [vmem:[#allocation7 + $0x1d0] sm:$0xff]
    %v222 = vld [vmem:[#allocation7 + $0x1d8] sm:$0xff]
    %v223 = vld [vmem:[#allocation7 + $0x1e0] sm:$0xff]
    %v224 = vld [vmem:[#allocation7 + $0x1e8] sm:$0xff]
    %v225 = vld [vmem:[#allocation7 + $0x1f0] sm:$0xff]
    %v226 = vld [vmem:[#allocation7 + $0x1f8] sm:$0xff]
    %v227 = vld [vmem:[#allocation7 + $0x200] sm:$0xff]
    %v228 = vld [vmem:[#allocation7 + $0x208] sm:$0xff]
    %v229 = vld [vmem:[#allocation7 + $0x210] sm:$0xff]
    %v230 = vld [vmem:[#allocation7 + $0x218] sm:$0xff]
    %v231 = vld [vmem:[#allocation7 + $0x220] sm:$0xff]
    %v232 = vld [vmem:[#allocation7 + $0x228] sm:$0xff]
    %v233 = vld [vmem:[#allocation7 + $0x230] sm:$0xff]
    %v234 = vld [vmem:[#allocation7 + $0x238] sm:$0xff]
    %v235 = vld [vmem:[#allocation7 + $0x240] sm:$0xff]
    %v236 = vld [vmem:[#allocation7 + $0x248] sm:$0xff]
    %v237 = vld [vmem:[#allocation7 + $0x250] sm:$0xff]
    %v238 = vld [vmem:[#allocation7 + $0x258] sm:$0xff]
    %v239 = vld [vmem:[#allocation7 + $0x260] sm:$0xff]
    %v240 = vld [vmem:[#allocation7 + $0x268] sm:$0xff]
    %v241 = vld [vmem:[#allocation7 + $0x270] sm:$0xff]
    %v242 = vld [vmem:[#allocation7 + $0x278] sm:$0xff]
    %v243 = vld [vmem:[#allocation7 + $0x280] sm:$0xff]
    %v244 = vld [vmem:[#allocation7 + $0x288] sm:$0xff]
    %v245 = vld [vmem:[#allocation7 + $0x290] sm:$0xff]
    %v246 = vld [vmem:[#allocation7 + $0x298] sm:$0xff]
    %v247 = vld [vmem:[#allocation7 + $0x2a0] sm:$0xff]
    %v248 = vld [vmem:[#allocation7 + $0x2a8] sm:$0xff]
    %v249 = vld [vmem:[#allocation7 + $0x2b0] sm:$0xff]
    %v250 = vld [vmem:[#allocation7 + $0x2b8] sm:$0xff]
    %v251 = vld [vmem:[#allocation7 + $0x2c0] sm:$0xff]
    %v252 = vld [vmem:[#allocation7 + $0x2c8] sm:$0xff]
    %v253 = vld [vmem:[#allocation7 + $0x2d0] sm:$0xff]
    %v254 = vld [vmem:[#allocation7 + $0x2d8] sm:$0xff]
    %v255 = vld [vmem:[#allocation7 + $0x2e0] sm:$0xff]
    %v256 = vld [vmem:[#allocation7 + $0x2e8] sm:$0xff]
    %v257 = vld [vmem:[#allocation7 + $0x2f0] sm:$0xff]
    %v258 = vld [vmem:[#allocation7 + $0x2f8] sm:$0xff]
    %v259 = vld [vmem:[#allocation7 + $0x300] sm:$0xff]
    %v260 = vld [vmem:[#allocation7 + $0x308] sm:$0xff]
    %v261 = vld [vmem:[#allocation7 + $0x310] sm:$0xff]
    %v262 = vld [vmem:[#allocation7 + $0x318] sm:$0xff]
    %v263 = vld [vmem:[#allocation7 + $0x320] sm:$0xff]
    %v264 = vld [vmem:[#allocation7 + $0x328] sm:$0xff]
    %v265 = vld [vmem:[#allocation7 + $0x330] sm:$0xff]
    %v266 = vld [vmem:[#allocation7 + $0x338] sm:$0xff]
    %v267 = vld [vmem:[#allocation7 + $0x340] sm:$0xff]
    %v268 = vld [vmem:[#allocation7 + $0x348] sm:$0xff]
    %v269 = vld [vmem:[#allocation7 + $0x350] sm:$0xff]
    %v270 = vld [vmem:[#allocation7 + $0x358] sm:$0xff]
    %v271 = vld [vmem:[#allocation7 + $0x360] sm:$0xff]
    %v272 = vld [vmem:[#allocation7 + $0x368] sm:$0xff]
    %v273 = vld [vmem:[#allocation7 + $0x370] sm:$0xff]
    %v274 = vld [vmem:[#allocation7 + $0x378] sm:$0xff]
    %v275 = vld [vmem:[#allocation7 + $0x380] sm:$0xff]
    %v276 = vld [vmem:[#allocation7 + $0x388] sm:$0xff]
    %v277 = vld [vmem:[#allocation7 + $0x390] sm:$0xff]
    %v278 = vld [vmem:[#allocation7 + $0x398] sm:$0xff]
    %v279 = vld [vmem:[#allocation7 + $0x3a0] sm:$0xff]
    %v280 = vld [vmem:[#allocation7 + $0x3a8] sm:$0xff]
    %v281 = vld [vmem:[#allocation7 + $0x3b0] sm:$0xff]
    %v282 = vld [vmem:[#allocation7 + $0x3b8] sm:$0xff]
    %v283 = vld [vmem:[#allocation7 + $0x3c0] sm:$0xff]
    %v284 = vld [vmem:[#allocation7 + $0x3c8] sm:$0xff]
    %v285 = vld [vmem:[#allocation7 + $0x3d0] sm:$0xff]
    %v286 = vld [vmem:[#allocation7 + $0x3d8] sm:$0xff]
    %v287 = vld [vmem:[#allocation7 + $0x3e0] sm:$0xff]
    %v288 = vld [vmem:[#allocation7 + $0x3e8] sm:$0xff]
    %v289 = vld [vmem:[#allocation7 + $0x3f0] sm:$0xff]
    %v290 = vld [vmem:[#allocation7 + $0x3f8] sm:$0xff]
    %v291 = vld [vmem:[#allocation7 + $0x400] sm:$0xff]
    %v292 = vld [vmem:[#allocation7 + $0x408] sm:$0xff]
    %v293 = vld [vmem:[#allocation7 + $0x410] sm:$0xff]
    %v294 = vld [vmem:[#allocation7 + $0x418] sm:$0xff]
    %v295 = vld [vmem:[#allocation7 + $0x420] sm:$0xff]
    %v296 = vld [vmem:[#allocation7 + $0x428] sm:$0xff]
    %v297 = vld [vmem:[#allocation7 + $0x430] sm:$0xff]
    %v298 = vld [vmem:[#allocation7 + $0x438] sm:$0xff]
    %v299 = vld [vmem:[#allocation7 + $0x440] sm:$0xff]
    %v300 = vld [vmem:[#allocation7 + $0x448] sm:$0xff]
    %v301 = vld [vmem:[#allocation7 + $0x450] sm:$0xff]
    %v302 = vld [vmem:[#allocation7 + $0x458] sm:$0xff]
    %v303 = vld [vmem:[#allocation7 + $0x460] sm:$0xff]
    %v304 = vld [vmem:[#allocation7 + $0x468] sm:$0xff]
    %v305 = vld [vmem:[#allocation7 + $0x470] sm:$0xff]
    %v306 = vld [vmem:[#allocation7 + $0x478] sm:$0xff]
    %v307 = vld [vmem:[#allocation7 + $0x480] sm:$0xff]
    %v308 = vld [vmem:[#allocation7 + $0x488] sm:$0xff]
    %v309 = vld [vmem:[#allocation7 + $0x490] sm:$0xff]
    %v310 = vld [vmem:[#allocation7 + $0x498] sm:$0xff]
    %v311 = vld [vmem:[#allocation7 + $0x4a0] sm:$0xff]
    %v312 = vld [vmem:[#allocation7 + $0x4a8] sm:$0xff]
    %v313 = vld [vmem:[#allocation7 + $0x4b0] sm:$0xff]
    %v314 = vld [vmem:[#allocation7 + $0x4b8] sm:$0xff]
    %v315 = vld [vmem:[#allocation7 + $0x4c0] sm:$0xff]
    %v316 = vld [vmem:[#allocation7 + $0x4c8] sm:$0xff]
    %v317 = vld [vmem:[#allocation7 + $0x4d0] sm:$0xff]
    %v318 = vld [vmem:[#allocation7 + $0x4d8] sm:$0xff]
    %v319 = vld [vmem:[#allocation7 + $0x4e0] sm:$0xff]
    %v320 = vld [vmem:[#allocation7 + $0x4e8] sm:$0xff]
    %v321 = vld [vmem:[#allocation7 + $0x4f0] sm:$0xff]
    %v322 = vld [vmem:[#allocation7 + $0x4f8] sm:$0xff]
    %v323 = vld [vmem:[#allocation7 + $0x500] sm:$0xff]
    %v324 = vld [vmem:[#allocation7 + $0x508] sm:$0xff]
    %v325 = vld [vmem:[#allocation7 + $0x510] sm:$0xff]
    %v326 = vld [vmem:[#allocation7 + $0x518] sm:$0xff]
    %v327 = vld [vmem:[#allocation7 + $0x520] sm:$0xff]
    %v328 = vld [vmem:[#allocation7 + $0x528] sm:$0xff]
    %v329 = vld [vmem:[#allocation7 + $0x530] sm:$0xff]
    %v330 = vld [vmem:[#allocation7 + $0x538] sm:$0xff]
    %v331 = vld [vmem:[#allocation7 + $0x540] sm:$0xff]
    %v332 = vld [vmem:[#allocation7 + $0x548] sm:$0xff]
    %v333 = vld [vmem:[#allocation7 + $0x550] sm:$0xff]
    %v334 = vld [vmem:[#allocation7 + $0x558] sm:$0xff]
    %v335 = vld [vmem:[#allocation7 + $0x560] sm:$0xff]
    %v336 = vld [vmem:[#allocation7 + $0x568] sm:$0xff]
    %v337 = vld [vmem:[#allocation7 + $0x570] sm:$0xff]
    %v338 = vld [vmem:[#allocation7 + $0x578] sm:$0xff]
    %v339 = vld [vmem:[#allocation7 + $0x580] sm:$0xff]
    %v340 = vld [vmem:[#allocation7 + $0x588] sm:$0xff]
    %v341 = vld [vmem:[#allocation7 + $0x590] sm:$0xff]
    %v342 = vld [vmem:[#allocation7 + $0x598] sm:$0xff]
    %v343 = vld [vmem:[#allocation7 + $0x5a0] sm:$0xff]
    %v344 = vld [vmem:[#allocation7 + $0x5a8] sm:$0xff]
    %v345 = vld [vmem:[#allocation7 + $0x5b0] sm:$0xff]
    %v346 = vld [vmem:[#allocation7 + $0x5b8] sm:$0xff]
    %v347 = vld [vmem:[#allocation7 + $0x5c0] sm:$0xff]
    %v348 = vld [vmem:[#allocation7 + $0x5c8] sm:$0xff]
    %v349 = vld [vmem:[#allocation7 + $0x5d0] sm:$0xff]
    %v350 = vld [vmem:[#allocation7 + $0x5d8] sm:$0xff]
    %v351 = vld [vmem:[#allocation7 + $0x5e0] sm:$0xff]
    %v352 = vld [vmem:[#allocation7 + $0x5e8] sm:$0xff]
    %v353 = vld [vmem:[#allocation7 + $0x5f0] sm:$0xff]
    %v354 = vld [vmem:[#allocation7 + $0x5f8] sm:$0xff]
    %v355 = vld [vmem:[#allocation7 + $0x600] sm:$0xff]
    %v356 = vld [vmem:[#allocation7 + $0x608] sm:$0xff]
    %v357 = vld [vmem:[#allocation7 + $0x610] sm:$0xff]
    %v358 = vld [vmem:[#allocation7 + $0x618] sm:$0xff]
    %v359 = vld [vmem:[#allocation7 + $0x620] sm:$0xff]
    %v360 = vld [vmem:[#allocation7 + $0x628] sm:$0xff]
    %v361 = vld [vmem:[#allocation7 + $0x630] sm:$0xff]
    %v362 = vld [vmem:[#allocation7 + $0x638] sm:$0xff]
    %v363 = vld [vmem:[#allocation7 + $0x640] sm:$0xff]
    %v364 = vld [vmem:[#allocation7 + $0x648] sm:$0xff]
    %v365 = vld [vmem:[#allocation7 + $0x650] sm:$0xff]
    %v366 = vld [vmem:[#allocation7 + $0x658] sm:$0xff]
    %v367 = vld [vmem:[#allocation7 + $0x660] sm:$0xff]
    %v368 = vld [vmem:[#allocation7 + $0x668] sm:$0xff]
    %v369 = vld [vmem:[#allocation7 + $0x670] sm:$0xff]
    %v370 = vld [vmem:[#allocation7 + $0x678] sm:$0xff]
    %v371 = vld [vmem:[#allocation7 + $0x680] sm:$0xff]
    %v372 = vld [vmem:[#allocation7 + $0x688] sm:$0xff]
    %v373 = vld [vmem:[#allocation7 + $0x690] sm:$0xff]
    %v374 = vld [vmem:[#allocation7 + $0x698] sm:$0xff]
    %v375 = vld [vmem:[#allocation7 + $0x6a0] sm:$0xff]
    %v376 = vld [vmem:[#allocation7 + $0x6a8] sm:$0xff]
    %v377 = vld [vmem:[#allocation7 + $0x6b0] sm:$0xff]
    %v378 = vld [vmem:[#allocation7 + $0x6b8] sm:$0xff]
    %v379 = vld [vmem:[#allocation7 + $0x6c0] sm:$0xff]
    %v380 = vld [vmem:[#allocation7 + $0x6c8] sm:$0xff]
    %v381 = vld [vmem:[#allocation7 + $0x6d0] sm:$0xff]
    %v382 = vld [vmem:[#allocation7 + $0x6d8] sm:$0xff]
    %v383 = vld [vmem:[#allocation7 + $0x6e0] sm:$0xff]
    %v384 = vld [vmem:[#allocation7 + $0x6e8] sm:$0xff]
    %v385 = vld [vmem:[#allocation7 + $0x6f0] sm:$0xff]
    %v386 = vld [vmem:[#allocation7 + $0x6f8] sm:$0xff]
    %v387 = vld [vmem:[#allocation7 + $0x700] sm:$0xff]
    %v388 = vld [vmem:[#allocation7 + $0x708] sm:$0xff]
    %v389 = vld [vmem:[#allocation7 + $0x710] sm:$0xff]
    %v390 = vld [vmem:[#allocation7 + $0x718] sm:$0xff]
    %v391 = vld [vmem:[#allocation7 + $0x720] sm:$0xff]
    %v392 = vld [vmem:[#allocation7 + $0x728] sm:$0xff]
    %v393 = vld [vmem:[#allocation7 + $0x730] sm:$0xff]
    %v394 = vld [vmem:[#allocation7 + $0x738] sm:$0xff]
    %v395 = vld [vmem:[#allocation7 + $0x740] sm:$0xff]
    %v396 = vld [vmem:[#allocation7 + $0x748] sm:$0xff]
    %v397 = vld [vmem:[#allocation7 + $0x750] sm:$0xff]
    %v398 = vld [vmem:[#allocation7 + $0x758] sm:$0xff]
    %v399 = vld [vmem:[#allocation7 + $0x760] sm:$0xff]
    %v400 = vld [vmem:[#allocation7 + $0x768] sm:$0xff]
    %v401 = vld [vmem:[#allocation7 + $0x770] sm:$0xff]
    %v402 = vld [vmem:[#allocation7 + $0x778] sm:$0xff]
    %v403 = vld [vmem:[#allocation7 + $0x780] sm:$0xff]
    %v404 = vld [vmem:[#allocation7 + $0x788] sm:$0xff]
    %v405 = vld [vmem:[#allocation7 + $0x790] sm:$0xff]
    %v406 = vld [vmem:[#allocation7 + $0x798] sm:$0xff]
    %v407 = vld [vmem:[#allocation7 + $0x7a0] sm:$0xff]
    %v408 = vld [vmem:[#allocation7 + $0x7a8] sm:$0xff]
    %v409 = vld [vmem:[#allocation7 + $0x7b0] sm:$0xff]
    %v410 = vld [vmem:[#allocation7 + $0x7b8] sm:$0xff]
    %v411 = vld [vmem:[#allocation7 + $0x7c0] sm:$0xff]
    %v412 = vld [vmem:[#allocation7 + $0x7c8] sm:$0xff]
    %v413 = vld [vmem:[#allocation7 + $0x7d0] sm:$0xff]
    %v414 = vld [vmem:[#allocation7 + $0x7d8] sm:$0xff]
    %v415 = vld [vmem:[#allocation7 + $0x7e0] sm:$0xff]
    %v416 = vld [vmem:[#allocation7 + $0x7e8] sm:$0xff]
    %v417 = vld [vmem:[#allocation7 + $0x7f0] sm:$0xff]
    %v418 = vld [vmem:[#allocation7 + $0x7f8] sm:$0xff]
    %v419 = vld [vmem:[#allocation7 + $0x800] sm:$0xff]
    %v420 = vld [vmem:[#allocation7 + $0x808] sm:$0xff]
    %v421 = vld [vmem:[#allocation7 + $0x810] sm:$0xff]
    %v422 = vld [vmem:[#allocation7 + $0x818] sm:$0xff]
    %v423 = vld [vmem:[#allocation7 + $0x820] sm:$0xff]
    %v424 = vld [vmem:[#allocation7 + $0x828] sm:$0xff]
    %v425 = vld [vmem:[#allocation7 + $0x830] sm:$0xff]
    %v426 = vld [vmem:[#allocation7 + $0x838] sm:$0xff]
    %v427 = vld [vmem:[#allocation7 + $0x840] sm:$0xff]
    %v428 = vld [vmem:[#allocation7 + $0x848] sm:$0xff]
    %v429 = vld [vmem:[#allocation7 + $0x850] sm:$0xff]
    %v430 = vld [vmem:[#allocation7 + $0x858] sm:$0xff]
    %v431 = vld [vmem:[#allocation7 + $0x860] sm:$0xff]
    %v432 = vld [vmem:[#allocation7 + $0x868] sm:$0xff]
    %v433 = vld [vmem:[#allocation7 + $0x870] sm:$0xff]
    %v434 = vld [vmem:[#allocation7 + $0x878] sm:$0xff]
    %v435 = vld [vmem:[#allocation7 + $0x880] sm:$0xff]
    %v436 = vld [vmem:[#allocation7 + $0x888] sm:$0xff]
    %v437 = vld [vmem:[#allocation7 + $0x890] sm:$0xff]
    %v438 = vld [vmem:[#allocation7 + $0x898] sm:$0xff]
    %v439 = vld [vmem:[#allocation7 + $0x8a0] sm:$0xff]
    %v440 = vld [vmem:[#allocation7 + $0x8a8] sm:$0xff]
    %v441 = vld [vmem:[#allocation7 + $0x8b0] sm:$0xff]
    %v442 = vld [vmem:[#allocation7 + $0x8b8] sm:$0xff]
    %v443 = vld [vmem:[#allocation7 + $0x8c0] sm:$0xff]
    %v444 = vld [vmem:[#allocation7 + $0x8c8] sm:$0xff]
    %v445 = vld [vmem:[#allocation7 + $0x8d0] sm:$0xff]
    %v446 = vld [vmem:[#allocation7 + $0x8d8] sm:$0xff]
    %v447 = vld [vmem:[#allocation7 + $0x8e0] sm:$0xff]
    %v448 = vld [vmem:[#allocation7 + $0x8e8] sm:$0xff]
    %v449 = vld [vmem:[#allocation7 + $0x8f0] sm:$0xff]
    %v450 = vld [vmem:[#allocation7 + $0x8f8] sm:$0xff]
    %v739 = vunpack.c.l.b16 %v163
    %v740 = vunpack.c.h.b16 %v163
    %v741 = vunpack.c.l.b16 %v164
    %v742 = vunpack.c.h.b16 %v164
    %v743 = vunpack.c.l.b16 %v165
    %v744 = vunpack.c.h.b16 %v165
    %v745 = vunpack.c.l.b16 %v166
    %v746 = vunpack.c.h.b16 %v166
    %v747 = vunpack.c.l.b16 %v167
    %v748 = vunpack.c.h.b16 %v167
    %v749 = vunpack.c.l.b16 %v168
    %v750 = vunpack.c.h.b16 %v168
    %v751 = vunpack.c.l.b16 %v169
    %v752 = vunpack.c.h.b16 %v169
    %v753 = vunpack.c.l.b16 %v170
    %v754 = vunpack.c.h.b16 %v170
    %v755 = vunpack.c.l.b16 %v171
    %v756 = vunpack.c.h.b16 %v171
    %v757 = vunpack.c.l.b16 %v172
    %v758 = vunpack.c.h.b16 %v172
    %v759 = vunpack.c.l.b16 %v173
    %v760 = vunpack.c.h.b16 %v173
    %v761 = vunpack.c.l.b16 %v174
    %v762 = vunpack.c.h.b16 %v174
    %v763 = vunpack.c.l.b16 %v175
    %v764 = vunpack.c.h.b16 %v175
    %v765 = vunpack.c.l.b16 %v176
    %v766 = vunpack.c.h.b16 %v176
    %v767 = vunpack.c.l.b16 %v177
    %v768 = vunpack.c.h.b16 %v177
    %v769 = vunpack.c.l.b16 %v178
    %v770 = vunpack.c.h.b16 %v178
    %v771 = vunpack.c.l.b16 %v179
    %v772 = vunpack.c.h.b16 %v179
    %v773 = vunpack.c.l.b16 %v180
    %v774 = vunpack.c.h.b16 %v180
    %v775 = vunpack.c.l.b16 %v181
    %v776 = vunpack.c.h.b16 %v181
    %v777 = vunpack.c.l.b16 %v182
    %v778 = vunpack.c.h.b16 %v182
    %v779 = vunpack.c.l.b16 %v183
    %v780 = vunpack.c.h.b16 %v183
    %v781 = vunpack.c.l.b16 %v184
    %v782 = vunpack.c.h.b16 %v184
    %v783 = vunpack.c.l.b16 %v185
    %v784 = vunpack.c.h.b16 %v185
    %v785 = vunpack.c.l.b16 %v186
    %v786 = vunpack.c.h.b16 %v186
    %v787 = vunpack.c.l.b16 %v187
    %v788 = vunpack.c.h.b16 %v187
    %v789 = vunpack.c.l.b16 %v188
    %v790 = vunpack.c.h.b16 %v188
    %v791 = vunpack.c.l.b16 %v189
    %v792 = vunpack.c.h.b16 %v189
    %v793 = vunpack.c.l.b16 %v190
    %v794 = vunpack.c.h.b16 %v190
    %v795 = vunpack.c.l.b16 %v191
    %v796 = vunpack.c.h.b16 %v191
    %v797 = vunpack.c.l.b16 %v192
    %v798 = vunpack.c.h.b16 %v192
    %v799 = vunpack.c.l.b16 %v193
    %v800 = vunpack.c.h.b16 %v193
    %v801 = vunpack.c.l.b16 %v194
    %v802 = vunpack.c.h.b16 %v194
    %v803 = vunpack.c.l.b16 %v195
    %v804 = vunpack.c.h.b16 %v195
    %v805 = vunpack.c.l.b16 %v196
    %v806 = vunpack.c.h.b16 %v196
    %v807 = vunpack.c.l.b16 %v197
    %v808 = vunpack.c.h.b16 %v197
    %v809 = vunpack.c.l.b16 %v198
    %v810 = vunpack.c.h.b16 %v198
    %v811 = vunpack.c.l.b16 %v199
    %v812 = vunpack.c.h.b16 %v199
    %v813 = vunpack.c.l.b16 %v200
    %v814 = vunpack.c.h.b16 %v200
    %v815 = vunpack.c.l.b16 %v201
    %v816 = vunpack.c.h.b16 %v201
    %v817 = vunpack.c.l.b16 %v202
    %v818 = vunpack.c.h.b16 %v202
    %v819 = vunpack.c.l.b16 %v203
    %v820 = vunpack.c.h.b16 %v203
    %v821 = vunpack.c.l.b16 %v204
    %v822 = vunpack.c.h.b16 %v204
    %v823 = vunpack.c.l.b16 %v205
    %v824 = vunpack.c.h.b16 %v205
    %v825 = vunpack.c.l.b16 %v206
    %v826 = vunpack.c.h.b16 %v206
    %v827 = vunpack.c.l.b16 %v207
    %v828 = vunpack.c.h.b16 %v207
    %v829 = vunpack.c.l.b16 %v208
    %v830 = vunpack.c.h.b16 %v208
    %v831 = vunpack.c.l.b16 %v209
    %v832 = vunpack.c.h.b16 %v209
    %v833 = vunpack.c.l.b16 %v210
    %v834 = vunpack.c.h.b16 %v210
    %v835 = vunpack.c.l.b16 %v211
    %v836 = vunpack.c.h.b16 %v211
    %v837 = vunpack.c.l.b16 %v212
    %v838 = vunpack.c.h.b16 %v212
    %v839 = vunpack.c.l.b16 %v213
    %v840 = vunpack.c.h.b16 %v213
    %v841 = vunpack.c.l.b16 %v214
    %v842 = vunpack.c.h.b16 %v214
    %v843 = vunpack.c.l.b16 %v215
    %v844 = vunpack.c.h.b16 %v215
    %v845 = vunpack.c.l.b16 %v216
    %v846 = vunpack.c.h.b16 %v216
    %v847 = vunpack.c.l.b16 %v217
    %v848 = vunpack.c.h.b16 %v217
    %v849 = vunpack.c.l.b16 %v218
    %v850 = vunpack.c.h.b16 %v218
    %v851 = vunpack.c.l.b16 %v219
    %v852 = vunpack.c.h.b16 %v219
    %v853 = vunpack.c.l.b16 %v220
    %v854 = vunpack.c.h.b16 %v220
    %v855 = vunpack.c.l.b16 %v221
    %v856 = vunpack.c.h.b16 %v221
    %v857 = vunpack.c.l.b16 %v222
    %v858 = vunpack.c.h.b16 %v222
    %v859 = vunpack.c.l.b16 %v223
    %v860 = vunpack.c.h.b16 %v223
    %v861 = vunpack.c.l.b16 %v224
    %v862 = vunpack.c.h.b16 %v224
    %v863 = vunpack.c.l.b16 %v225
    %v864 = vunpack.c.h.b16 %v225
    %v865 = vunpack.c.l.b16 %v226
    %v866 = vunpack.c.h.b16 %v226
    %v867 = vunpack.c.l.b16 %v227
    %v868 = vunpack.c.h.b16 %v227
    %v869 = vunpack.c.l.b16 %v228
    %v870 = vunpack.c.h.b16 %v228
    %v871 = vunpack.c.l.b16 %v229
    %v872 = vunpack.c.h.b16 %v229
    %v873 = vunpack.c.l.b16 %v230
    %v874 = vunpack.c.h.b16 %v230
    %v875 = vunpack.c.l.b16 %v231
    %v876 = vunpack.c.h.b16 %v231
    %v877 = vunpack.c.l.b16 %v232
    %v878 = vunpack.c.h.b16 %v232
    %v879 = vunpack.c.l.b16 %v233
    %v880 = vunpack.c.h.b16 %v233
    %v881 = vunpack.c.l.b16 %v234
    %v882 = vunpack.c.h.b16 %v234
    %v883 = vunpack.c.l.b16 %v235
    %v884 = vunpack.c.h.b16 %v235
    %v885 = vunpack.c.l.b16 %v236
    %v886 = vunpack.c.h.b16 %v236
    %v887 = vunpack.c.l.b16 %v237
    %v888 = vunpack.c.h.b16 %v237
    %v889 = vunpack.c.l.b16 %v238
    %v890 = vunpack.c.h.b16 %v238
    %v891 = vunpack.c.l.b16 %v239
    %v892 = vunpack.c.h.b16 %v239
    %v893 = vunpack.c.l.b16 %v240
    %v894 = vunpack.c.h.b16 %v240
    %v895 = vunpack.c.l.b16 %v241
    %v896 = vunpack.c.h.b16 %v241
    %v897 = vunpack.c.l.b16 %v242
    %v898 = vunpack.c.h.b16 %v242
    %v899 = vunpack.c.l.b16 %v243
    %v900 = vunpack.c.h.b16 %v243
    %v901 = vunpack.c.l.b16 %v244
    %v902 = vunpack.c.h.b16 %v244
    %v903 = vunpack.c.l.b16 %v245
    %v904 = vunpack.c.h.b16 %v245
    %v905 = vunpack.c.l.b16 %v246
    %v906 = vunpack.c.h.b16 %v246
    %v907 = vunpack.c.l.b16 %v247
    %v908 = vunpack.c.h.b16 %v247
    %v909 = vunpack.c.l.b16 %v248
    %v910 = vunpack.c.h.b16 %v248
    %v911 = vunpack.c.l.b16 %v249
    %v912 = vunpack.c.h.b16 %v249
    %v913 = vunpack.c.l.b16 %v250
    %v914 = vunpack.c.h.b16 %v250
    %v915 = vunpack.c.l.b16 %v251
    %v916 = vunpack.c.h.b16 %v251
    %v917 = vunpack.c.l.b16 %v252
    %v918 = vunpack.c.h.b16 %v252
    %v919 = vunpack.c.l.b16 %v253
    %v920 = vunpack.c.h.b16 %v253
    %v921 = vunpack.c.l.b16 %v254
    %v922 = vunpack.c.h.b16 %v254
    %v923 = vunpack.c.l.b16 %v255
    %v924 = vunpack.c.h.b16 %v255
    %v925 = vunpack.c.l.b16 %v256
    %v926 = vunpack.c.h.b16 %v256
    %v927 = vunpack.c.l.b16 %v257
    %v928 = vunpack.c.h.b16 %v257
    %v929 = vunpack.c.l.b16 %v258
    %v930 = vunpack.c.h.b16 %v258
    %v931 = vunpack.c.l.b16 %v259
    %v932 = vunpack.c.h.b16 %v259
    %v933 = vunpack.c.l.b16 %v260
    %v934 = vunpack.c.h.b16 %v260
    %v935 = vunpack.c.l.b16 %v261
    %v936 = vunpack.c.h.b16 %v261
    %v937 = vunpack.c.l.b16 %v262
    %v938 = vunpack.c.h.b16 %v262
    %v939 = vunpack.c.l.b16 %v263
    %v940 = vunpack.c.h.b16 %v263
    %v941 = vunpack.c.l.b16 %v264
    %v942 = vunpack.c.h.b16 %v264
    %v943 = vunpack.c.l.b16 %v265
    %v944 = vunpack.c.h.b16 %v265
    %v945 = vunpack.c.l.b16 %v266
    %v946 = vunpack.c.h.b16 %v266
    %v947 = vunpack.c.l.b16 %v267
    %v948 = vunpack.c.h.b16 %v267
    %v949 = vunpack.c.l.b16 %v268
    %v950 = vunpack.c.h.b16 %v268
    %v951 = vunpack.c.l.b16 %v269
    %v952 = vunpack.c.h.b16 %v269
    %v953 = vunpack.c.l.b16 %v270
    %v954 = vunpack.c.h.b16 %v270
    %v955 = vunpack.c.l.b16 %v271
    %v956 = vunpack.c.h.b16 %v271
    %v957 = vunpack.c.l.b16 %v272
    %v958 = vunpack.c.h.b16 %v272
    %v959 = vunpack.c.l.b16 %v273
    %v960 = vunpack.c.h.b16 %v273
    %v961 = vunpack.c.l.b16 %v274
    %v962 = vunpack.c.h.b16 %v274
    %v963 = vunpack.c.l.b16 %v275
    %v964 = vunpack.c.h.b16 %v275
    %v965 = vunpack.c.l.b16 %v276
    %v966 = vunpack.c.h.b16 %v276
    %v967 = vunpack.c.l.b16 %v277
    %v968 = vunpack.c.h.b16 %v277
    %v969 = vunpack.c.l.b16 %v278
    %v970 = vunpack.c.h.b16 %v278
    %v971 = vunpack.c.l.b16 %v279
    %v972 = vunpack.c.h.b16 %v279
    %v973 = vunpack.c.l.b16 %v280
    %v974 = vunpack.c.h.b16 %v280
    %v975 = vunpack.c.l.b16 %v281
    %v976 = vunpack.c.h.b16 %v281
    %v977 = vunpack.c.l.b16 %v282
    %v978 = vunpack.c.h.b16 %v282
    %v979 = vunpack.c.l.b16 %v283
    %v980 = vunpack.c.h.b16 %v283
    %v981 = vunpack.c.l.b16 %v284
    %v982 = vunpack.c.h.b16 %v284
    %v983 = vunpack.c.l.b16 %v285
    %v984 = vunpack.c.h.b16 %v285
    %v985 = vunpack.c.l.b16 %v286
    %v986 = vunpack.c.h.b16 %v286
    %v987 = vunpack.c.l.b16 %v287
    %v988 = vunpack.c.h.b16 %v287
    %v989 = vunpack.c.l.b16 %v288
    %v990 = vunpack.c.h.b16 %v288
    %v991 = vunpack.c.l.b16 %v289
    %v992 = vunpack.c.h.b16 %v289
    %v993 = vunpack.c.l.b16 %v290
    %v994 = vunpack.c.h.b16 %v290
    %v995 = vunpack.c.l.b16 %v291
    %v996 = vunpack.c.h.b16 %v291
    %v997 = vunpack.c.l.b16 %v292
    %v998 = vunpack.c.h.b16 %v292
    %v999 = vunpack.c.l.b16 %v293
    %v1000 = vunpack.c.h.b16 %v293
    %v1001 = vunpack.c.l.b16 %v294
    %v1002 = vunpack.c.h.b16 %v294
    %v1003 = vunpack.c.l.b16 %v295
    %v1004 = vunpack.c.h.b16 %v295
    %v1005 = vunpack.c.l.b16 %v296
    %v1006 = vunpack.c.h.b16 %v296
    %v1007 = vunpack.c.l.b16 %v297
    %v1008 = vunpack.c.h.b16 %v297
    %v1009 = vunpack.c.l.b16 %v298
    %v1010 = vunpack.c.h.b16 %v298
    %v1011 = vunpack.c.l.b16 %v299
    %v1012 = vunpack.c.h.b16 %v299
    %v1013 = vunpack.c.l.b16 %v300
    %v1014 = vunpack.c.h.b16 %v300
    %v1015 = vunpack.c.l.b16 %v301
    %v1016 = vunpack.c.h.b16 %v301
    %v1017 = vunpack.c.l.b16 %v302
    %v1018 = vunpack.c.h.b16 %v302
    %v1019 = vunpack.c.l.b16 %v303
    %v1020 = vunpack.c.h.b16 %v303
    %v1021 = vunpack.c.l.b16 %v304
    %v1022 = vunpack.c.h.b16 %v304
    %v1023 = vunpack.c.l.b16 %v305
    %v1024 = vunpack.c.h.b16 %v305
    %v1025 = vunpack.c.l.b16 %v306
    %v1026 = vunpack.c.h.b16 %v306
    %v1027 = vunpack.c.l.b16 %v307
    %v1028 = vunpack.c.h.b16 %v307
    %v1029 = vunpack.c.l.b16 %v308
    %v1030 = vunpack.c.h.b16 %v308
    %v1031 = vunpack.c.l.b16 %v309
    %v1032 = vunpack.c.h.b16 %v309
    %v1033 = vunpack.c.l.b16 %v310
    %v1034 = vunpack.c.h.b16 %v310
    %v1035 = vunpack.c.l.b16 %v311
    %v1036 = vunpack.c.h.b16 %v311
    %v1037 = vunpack.c.l.b16 %v312
    %v1038 = vunpack.c.h.b16 %v312
    %v1039 = vunpack.c.l.b16 %v313
    %v1040 = vunpack.c.h.b16 %v313
    %v1041 = vunpack.c.l.b16 %v314
    %v1042 = vunpack.c.h.b16 %v314
    %v1043 = vunpack.c.l.b16 %v315
    %v1044 = vunpack.c.h.b16 %v315
    %v1045 = vunpack.c.l.b16 %v316
    %v1046 = vunpack.c.h.b16 %v316
    %v1047 = vunpack.c.l.b16 %v317
    %v1048 = vunpack.c.h.b16 %v317
    %v1049 = vunpack.c.l.b16 %v318
    %v1050 = vunpack.c.h.b16 %v318
    %v1051 = vunpack.c.l.b16 %v319
    %v1052 = vunpack.c.h.b16 %v319
    %v1053 = vunpack.c.l.b16 %v320
    %v1054 = vunpack.c.h.b16 %v320
    %v1055 = vunpack.c.l.b16 %v321
    %v1056 = vunpack.c.h.b16 %v321
    %v1057 = vunpack.c.l.b16 %v322
    %v1058 = vunpack.c.h.b16 %v322
    %v1059 = vunpack.c.l.b16 %v323
    %v1060 = vunpack.c.h.b16 %v323
    %v1061 = vunpack.c.l.b16 %v324
    %v1062 = vunpack.c.h.b16 %v324
    %v1063 = vunpack.c.l.b16 %v325
    %v1064 = vunpack.c.h.b16 %v325
    %v1065 = vunpack.c.l.b16 %v326
    %v1066 = vunpack.c.h.b16 %v326
    %v1067 = vunpack.c.l.b16 %v327
    %v1068 = vunpack.c.h.b16 %v327
    %v1069 = vunpack.c.l.b16 %v328
    %v1070 = vunpack.c.h.b16 %v328
    %v1071 = vunpack.c.l.b16 %v329
    %v1072 = vunpack.c.h.b16 %v329
    %v1073 = vunpack.c.l.b16 %v330
    %v1074 = vunpack.c.h.b16 %v330
    %v1075 = vunpack.c.l.b16 %v331
    %v1076 = vunpack.c.h.b16 %v331
    %v1077 = vunpack.c.l.b16 %v332
    %v1078 = vunpack.c.h.b16 %v332
    %v1079 = vunpack.c.l.b16 %v333
    %v1080 = vunpack.c.h.b16 %v333
    %v1081 = vunpack.c.l.b16 %v334
    %v1082 = vunpack.c.h.b16 %v334
    %v1083 = vunpack.c.l.b16 %v335
    %v1084 = vunpack.c.h.b16 %v335
    %v1085 = vunpack.c.l.b16 %v336
    %v1086 = vunpack.c.h.b16 %v336
    %v1087 = vunpack.c.l.b16 %v337
    %v1088 = vunpack.c.h.b16 %v337
    %v1089 = vunpack.c.l.b16 %v338
    %v1090 = vunpack.c.h.b16 %v338
    %v1091 = vunpack.c.l.b16 %v339
    %v1092 = vunpack.c.h.b16 %v339
    %v1093 = vunpack.c.l.b16 %v340
    %v1094 = vunpack.c.h.b16 %v340
    %v1095 = vunpack.c.l.b16 %v341
    %v1096 = vunpack.c.h.b16 %v341
    %v1097 = vunpack.c.l.b16 %v342
    %v1098 = vunpack.c.h.b16 %v342
    %v1099 = vunpack.c.l.b16 %v343
    %v1100 = vunpack.c.h.b16 %v343
    %v1101 = vunpack.c.l.b16 %v344
    %v1102 = vunpack.c.h.b16 %v344
    %v1103 = vunpack.c.l.b16 %v345
    %v1104 = vunpack.c.h.b16 %v345
    %v1105 = vunpack.c.l.b16 %v346
    %v1106 = vunpack.c.h.b16 %v346
    %v1107 = vunpack.c.l.b16 %v347
    %v1108 = vunpack.c.h.b16 %v347
    %v1109 = vunpack.c.l.b16 %v348
    %v1110 = vunpack.c.h.b16 %v348
    %v1111 = vunpack.c.l.b16 %v349
    %v1112 = vunpack.c.h.b16 %v349
    %v1113 = vunpack.c.l.b16 %v350
    %v1114 = vunpack.c.h.b16 %v350
    %v1115 = vunpack.c.l.b16 %v351
    %v1116 = vunpack.c.h.b16 %v351
    %v1117 = vunpack.c.l.b16 %v352
    %v1118 = vunpack.c.h.b16 %v352
    %v1119 = vunpack.c.l.b16 %v353
    %v1120 = vunpack.c.h.b16 %v353
    %v1121 = vunpack.c.l.b16 %v354
    %v1122 = vunpack.c.h.b16 %v354
    %v1123 = vunpack.c.l.b16 %v355
    %v1124 = vunpack.c.h.b16 %v355
    %v1125 = vunpack.c.l.b16 %v356
    %v1126 = vunpack.c.h.b16 %v356
    %v1127 = vunpack.c.l.b16 %v357
    %v1128 = vunpack.c.h.b16 %v357
    %v1129 = vunpack.c.l.b16 %v358
    %v1130 = vunpack.c.h.b16 %v358
    %v1131 = vunpack.c.l.b16 %v359
    %v1132 = vunpack.c.h.b16 %v359
    %v1133 = vunpack.c.l.b16 %v360
    %v1134 = vunpack.c.h.b16 %v360
    %v1135 = vunpack.c.l.b16 %v361
    %v1136 = vunpack.c.h.b16 %v361
    %v1137 = vunpack.c.l.b16 %v362
    %v1138 = vunpack.c.h.b16 %v362
    %v1139 = vunpack.c.l.b16 %v363
    %v1140 = vunpack.c.h.b16 %v363
    %v1141 = vunpack.c.l.b16 %v364
    %v1142 = vunpack.c.h.b16 %v364
    %v1143 = vunpack.c.l.b16 %v365
    %v1144 = vunpack.c.h.b16 %v365
    %v1145 = vunpack.c.l.b16 %v366
    %v1146 = vunpack.c.h.b16 %v366
    %v1147 = vunpack.c.l.b16 %v367
    %v1148 = vunpack.c.h.b16 %v367
    %v1149 = vunpack.c.l.b16 %v368
    %v1150 = vunpack.c.h.b16 %v368
    %v1151 = vunpack.c.l.b16 %v369
    %v1152 = vunpack.c.h.b16 %v369
    %v1153 = vunpack.c.l.b16 %v370
    %v1154 = vunpack.c.h.b16 %v370
    %v1155 = vunpack.c.l.b16 %v371
    %v1156 = vunpack.c.h.b16 %v371
    %v1157 = vunpack.c.l.b16 %v372
    %v1158 = vunpack.c.h.b16 %v372
    %v1159 = vunpack.c.l.b16 %v373
    %v1160 = vunpack.c.h.b16 %v373
    %v1161 = vunpack.c.l.b16 %v374
    %v1162 = vunpack.c.h.b16 %v374
    %v1163 = vunpack.c.l.b16 %v375
    %v1164 = vunpack.c.h.b16 %v375
    %v1165 = vunpack.c.l.b16 %v376
    %v1166 = vunpack.c.h.b16 %v376
    %v1167 = vunpack.c.l.b16 %v377
    %v1168 = vunpack.c.h.b16 %v377
    %v1169 = vunpack.c.l.b16 %v378
    %v1170 = vunpack.c.h.b16 %v378
    %v1171 = vunpack.c.l.b16 %v379
    %v1172 = vunpack.c.h.b16 %v379
    %v1173 = vunpack.c.l.b16 %v380
    %v1174 = vunpack.c.h.b16 %v380
    %v1175 = vunpack.c.l.b16 %v381
    %v1176 = vunpack.c.h.b16 %v381
    %v1177 = vunpack.c.l.b16 %v382
    %v1178 = vunpack.c.h.b16 %v382
    %v1179 = vunpack.c.l.b16 %v383
    %v1180 = vunpack.c.h.b16 %v383
    %v1181 = vunpack.c.l.b16 %v384
    %v1182 = vunpack.c.h.b16 %v384
    %v1183 = vunpack.c.l.b16 %v385
    %v1184 = vunpack.c.h.b16 %v385
    %v1185 = vunpack.c.l.b16 %v386
    %v1186 = vunpack.c.h.b16 %v386
    %v1187 = vunpack.c.l.b16 %v387
    %v1188 = vunpack.c.h.b16 %v387
    %v1189 = vunpack.c.l.b16 %v388
    %v1190 = vunpack.c.h.b16 %v388
    %v1191 = vunpack.c.l.b16 %v389
    %v1192 = vunpack.c.h.b16 %v389
    %v1193 = vunpack.c.l.b16 %v390
    %v1194 = vunpack.c.h.b16 %v390
    %v1195 = vunpack.c.l.b16 %v391
    %v1196 = vunpack.c.h.b16 %v391
    %v1197 = vunpack.c.l.b16 %v392
    %v1198 = vunpack.c.h.b16 %v392
    %v1199 = vunpack.c.l.b16 %v393
    %v1200 = vunpack.c.h.b16 %v393
    %v1201 = vunpack.c.l.b16 %v394
    %v1202 = vunpack.c.h.b16 %v394
    %v1203 = vunpack.c.l.b16 %v395
    %v1204 = vunpack.c.h.b16 %v395
    %v1205 = vunpack.c.l.b16 %v396
    %v1206 = vunpack.c.h.b16 %v396
    %v1207 = vunpack.c.l.b16 %v397
    %v1208 = vunpack.c.h.b16 %v397
    %v1209 = vunpack.c.l.b16 %v398
    %v1210 = vunpack.c.h.b16 %v398
    %v1211 = vunpack.c.l.b16 %v399
    %v1212 = vunpack.c.h.b16 %v399
    %v1213 = vunpack.c.l.b16 %v400
    %v1214 = vunpack.c.h.b16 %v400
    %v1215 = vunpack.c.l.b16 %v401
    %v1216 = vunpack.c.h.b16 %v401
    %v1217 = vunpack.c.l.b16 %v402
    %v1218 = vunpack.c.h.b16 %v402
    %v1219 = vunpack.c.l.b16 %v403
    %v1220 = vunpack.c.h.b16 %v403
    %v1221 = vunpack.c.l.b16 %v404
    %v1222 = vunpack.c.h.b16 %v404
    %v1223 = vunpack.c.l.b16 %v405
    %v1224 = vunpack.c.h.b16 %v405
    %v1225 = vunpack.c.l.b16 %v406
    %v1226 = vunpack.c.h.b16 %v406
    %v1227 = vunpack.c.l.b16 %v407
    %v1228 = vunpack.c.h.b16 %v407
    %v1229 = vunpack.c.l.b16 %v408
    %v1230 = vunpack.c.h.b16 %v408
    %v1231 = vunpack.c.l.b16 %v409
    %v1232 = vunpack.c.h.b16 %v409
    %v1233 = vunpack.c.l.b16 %v410
    %v1234 = vunpack.c.h.b16 %v410
    %v1235 = vunpack.c.l.b16 %v411
    %v1236 = vunpack.c.h.b16 %v411
    %v1237 = vunpack.c.l.b16 %v412
    %v1238 = vunpack.c.h.b16 %v412
    %v1239 = vunpack.c.l.b16 %v413
    %v1240 = vunpack.c.h.b16 %v413
    %v1241 = vunpack.c.l.b16 %v414
    %v1242 = vunpack.c.h.b16 %v414
    %v1243 = vunpack.c.l.b16 %v415
    %v1244 = vunpack.c.h.b16 %v415
    %v1245 = vunpack.c.l.b16 %v416
    %v1246 = vunpack.c.h.b16 %v416
    %v1247 = vunpack.c.l.b16 %v417
    %v1248 = vunpack.c.h.b16 %v417
    %v1249 = vunpack.c.l.b16 %v418
    %v1250 = vunpack.c.h.b16 %v418
    %v1251 = vunpack.c.l.b16 %v419
    %v1252 = vunpack.c.h.b16 %v419
    %v1253 = vunpack.c.l.b16 %v420
    %v1254 = vunpack.c.h.b16 %v420
    %v1255 = vunpack.c.l.b16 %v421
    %v1256 = vunpack.c.h.b16 %v421
    %v1257 = vunpack.c.l.b16 %v422
    %v1258 = vunpack.c.h.b16 %v422
    %v1259 = vunpack.c.l.b16 %v423
    %v1260 = vunpack.c.h.b16 %v423
    %v1261 = vunpack.c.l.b16 %v424
    %v1262 = vunpack.c.h.b16 %v424
    %v1263 = vunpack.c.l.b16 %v425
    %v1264 = vunpack.c.h.b16 %v425
    %v1265 = vunpack.c.l.b16 %v426
    %v1266 = vunpack.c.h.b16 %v426
    %v1267 = vunpack.c.l.b16 %v427
    %v1268 = vunpack.c.h.b16 %v427
    %v1269 = vunpack.c.l.b16 %v428
    %v1270 = vunpack.c.h.b16 %v428
    %v1271 = vunpack.c.l.b16 %v429
    %v1272 = vunpack.c.h.b16 %v429
    %v1273 = vunpack.c.l.b16 %v430
    %v1274 = vunpack.c.h.b16 %v430
    %v1275 = vunpack.c.l.b16 %v431
    %v1276 = vunpack.c.h.b16 %v431
    %v1277 = vunpack.c.l.b16 %v432
    %v1278 = vunpack.c.h.b16 %v432
    %v1279 = vunpack.c.l.b16 %v433
    %v1280 = vunpack.c.h.b16 %v433
    %v1281 = vunpack.c.l.b16 %v434
    %v1282 = vunpack.c.h.b16 %v434
    %v1283 = vunpack.c.l.b16 %v435
    %v1284 = vunpack.c.h.b16 %v435
    %v1285 = vunpack.c.l.b16 %v436
    %v1286 = vunpack.c.h.b16 %v436
    %v1287 = vunpack.c.l.b16 %v437
    %v1288 = vunpack.c.h.b16 %v437
    %v1289 = vunpack.c.l.b16 %v438
    %v1290 = vunpack.c.h.b16 %v438
    %v1291 = vunpack.c.l.b16 %v439
    %v1292 = vunpack.c.h.b16 %v439
    %v1293 = vunpack.c.l.b16 %v440
    %v1294 = vunpack.c.h.b16 %v440
    %v1295 = vunpack.c.l.b16 %v441
    %v1296 = vunpack.c.h.b16 %v441
    %v1297 = vunpack.c.l.b16 %v442
    %v1298 = vunpack.c.h.b16 %v442
    %v1299 = vunpack.c.l.b16 %v443
    %v1300 = vunpack.c.h.b16 %v443
    %v1301 = vunpack.c.l.b16 %v444
    %v1302 = vunpack.c.h.b16 %v444
    %v1303 = vunpack.c.l.b16 %v445
    %v1304 = vunpack.c.h.b16 %v445
    %v1305 = vunpack.c.l.b16 %v446
    %v1306 = vunpack.c.h.b16 %v446
    %v1307 = vunpack.c.l.b16 %v447
    %v1308 = vunpack.c.h.b16 %v447
    %v1309 = vunpack.c.l.b16 %v448
    %v1310 = vunpack.c.h.b16 %v448
    %v1311 = vunpack.c.l.b16 %v449
    %v1312 = vunpack.c.h.b16 %v449
    %v1313 = vunpack.c.l.b16 %v450
    %v1314 = vunpack.c.h.b16 %v450
    %v1315 = vpack.c.b16 %v745, %v739
    %v1316 = vpack.c.b16 %v746, %v740
    %v1317 = vpack.c.b16 %v747, %v741
    %v1318 = vpack.c.b16 %v748, %v742
    %v1319 = vpack.c.b16 %v749, %v743
    %v1320 = vpack.c.b16 %v750, %v744
    %v1321 = vpack.c.b16 %v757, %v751
    %v1322 = vpack.c.b16 %v758, %v752
    %v1323 = vpack.c.b16 %v759, %v753
    %v1324 = vpack.c.b16 %v760, %v754
    %v1325 = vpack.c.b16 %v761, %v755
    %v1326 = vpack.c.b16 %v762, %v756
    %v1327 = vpack.c.b16 %v769, %v763
    %v1328 = vpack.c.b16 %v770, %v764
    %v1329 = vpack.c.b16 %v771, %v765
    %v1330 = vpack.c.b16 %v772, %v766
    %v1331 = vpack.c.b16 %v773, %v767
    %v1332 = vpack.c.b16 %v774, %v768
    %v1333 = vpack.c.b16 %v781, %v775
    %v1334 = vpack.c.b16 %v782, %v776
    %v1335 = vpack.c.b16 %v783, %v777
    %v1336 = vpack.c.b16 %v784, %v778
    %v1337 = vpack.c.b16 %v785, %v779
    %v1338 = vpack.c.b16 %v786, %v780
    %v1339 = vpack.c.b16 %v793, %v787
    %v1340 = vpack.c.b16 %v794, %v788
    %v1341 = vpack.c.b16 %v795, %v789
    %v1342 = vpack.c.b16 %v796, %v790
    %v1343 = vpack.c.b16 %v797, %v791
    %v1344 = vpack.c.b16 %v798, %v792
    %v1345 = vpack.c.b16 %v805, %v799
    %v1346 = vpack.c.b16 %v806, %v800
    %v1347 = vpack.c.b16 %v807, %v801
    %v1348 = vpack.c.b16 %v808, %v802
    %v1349 = vpack.c.b16 %v809, %v803
    %v1350 = vpack.c.b16 %v810, %v804
    %v1351 = vpack.c.b16 %v817, %v811
    %v1352 = vpack.c.b16 %v818, %v812
    %v1353 = vpack.c.b16 %v819, %v813
    %v1354 = vpack.c.b16 %v820, %v814
    %v1355 = vpack.c.b16 %v821, %v815
    %v1356 = vpack.c.b16 %v822, %v816
    %v1357 = vpack.c.b16 %v829, %v823
    %v1358 = vpack.c.b16 %v830, %v824
    %v1359 = vpack.c.b16 %v831, %v825
    %v1360 = vpack.c.b16 %v832, %v826
    %v1361 = vpack.c.b16 %v833, %v827
    %v1362 = vpack.c.b16 %v834, %v828
    %v1363 = vpack.c.b16 %v841, %v835
    %v1364 = vpack.c.b16 %v842, %v836
    %v1365 = vpack.c.b16 %v843, %v837
    %v1366 = vpack.c.b16 %v844, %v838
    %v1367 = vpack.c.b16 %v845, %v839
    %v1368 = vpack.c.b16 %v846, %v840
    %v1369 = vpack.c.b16 %v853, %v847
    %v1370 = vpack.c.b16 %v854, %v848
    %v1371 = vpack.c.b16 %v855, %v849
    %v1372 = vpack.c.b16 %v856, %v850
    %v1373 = vpack.c.b16 %v857, %v851
    %v1374 = vpack.c.b16 %v858, %v852
    %v1375 = vpack.c.b16 %v865, %v859
    %v1376 = vpack.c.b16 %v866, %v860
    %v1377 = vpack.c.b16 %v867, %v861
    %v1378 = vpack.c.b16 %v868, %v862
    %v1379 = vpack.c.b16 %v869, %v863
    %v1380 = vpack.c.b16 %v870, %v864
    %v1381 = vpack.c.b16 %v877, %v871
    %v1382 = vpack.c.b16 %v878, %v872
    %v1383 = vpack.c.b16 %v879, %v873
    %v1384 = vpack.c.b16 %v880, %v874
    %v1385 = vpack.c.b16 %v881, %v875
    %v1386 = vpack.c.b16 %v882, %v876
    %v1387 = vpack.c.b16 %v889, %v883
    %v1388 = vpack.c.b16 %v890, %v884
    %v1389 = vpack.c.b16 %v891, %v885
    %v1390 = vpack.c.b16 %v892, %v886
    %v1391 = vpack.c.b16 %v893, %v887
    %v1392 = vpack.c.b16 %v894, %v888
    %v1393 = vpack.c.b16 %v901, %v895
    %v1394 = vpack.c.b16 %v902, %v896
    %v1395 = vpack.c.b16 %v903, %v897
    %v1396 = vpack.c.b16 %v904, %v898
    %v1397 = vpack.c.b16 %v905, %v899
    %v1398 = vpack.c.b16 %v906, %v900
    %v1399 = vpack.c.b16 %v913, %v907
    %v1400 = vpack.c.b16 %v914, %v908
    %v1401 = vpack.c.b16 %v915, %v909
    %v1402 = vpack.c.b16 %v916, %v910
    %v1403 = vpack.c.b16 %v917, %v911
    %v1404 = vpack.c.b16 %v918, %v912
    %v1405 = vpack.c.b16 %v925, %v919
    %v1406 = vpack.c.b16 %v926, %v920
    %v1407 = vpack.c.b16 %v927, %v921
    %v1408 = vpack.c.b16 %v928, %v922
    %v1409 = vpack.c.b16 %v929, %v923
    %v1410 = vpack.c.b16 %v930, %v924
    %v1411 = vpack.c.b16 %v937, %v931
    %v1412 = vpack.c.b16 %v938, %v932
    %v1413 = vpack.c.b16 %v939, %v933
    %v1414 = vpack.c.b16 %v940, %v934
    %v1415 = vpack.c.b16 %v941, %v935
    %v1416 = vpack.c.b16 %v942, %v936
    %v1417 = vpack.c.b16 %v949, %v943
    %v1418 = vpack.c.b16 %v950, %v944
    %v1419 = vpack.c.b16 %v951, %v945
    %v1420 = vpack.c.b16 %v952, %v946
    %v1421 = vpack.c.b16 %v953, %v947
    %v1422 = vpack.c.b16 %v954, %v948
    %v1423 = vpack.c.b16 %v961, %v955
    %v1424 = vpack.c.b16 %v962, %v956
    %v1425 = vpack.c.b16 %v963, %v957
    %v1426 = vpack.c.b16 %v964, %v958
    %v1427 = vpack.c.b16 %v965, %v959
    %v1428 = vpack.c.b16 %v966, %v960
    %v1429 = vpack.c.b16 %v973, %v967
    %v1430 = vpack.c.b16 %v974, %v968
    %v1431 = vpack.c.b16 %v975, %v969
    %v1432 = vpack.c.b16 %v976, %v970
    %v1433 = vpack.c.b16 %v977, %v971
    %v1434 = vpack.c.b16 %v978, %v972
    %v1435 = vpack.c.b16 %v985, %v979
    %v1436 = vpack.c.b16 %v986, %v980
    %v1437 = vpack.c.b16 %v987, %v981
    %v1438 = vpack.c.b16 %v988, %v982
    %v1439 = vpack.c.b16 %v989, %v983
    %v1440 = vpack.c.b16 %v990, %v984
    %v1441 = vpack.c.b16 %v997, %v991
    %v1442 = vpack.c.b16 %v998, %v992
    %v1443 = vpack.c.b16 %v999, %v993
    %v1444 = vpack.c.b16 %v1000, %v994
    %v1445 = vpack.c.b16 %v1001, %v995
    %v1446 = vpack.c.b16 %v1002, %v996
    %v1447 = vpack.c.b16 %v1009, %v1003
    %v1448 = vpack.c.b16 %v1010, %v1004
    %v1449 = vpack.c.b16 %v1011, %v1005
    %v1450 = vpack.c.b16 %v1012, %v1006
    %v1451 = vpack.c.b16 %v1013, %v1007
    %v1452 = vpack.c.b16 %v1014, %v1008
    %v1453 = vpack.c.b16 %v1021, %v1015
    %v1454 = vpack.c.b16 %v1022, %v1016
    %v1455 = vpack.c.b16 %v1023, %v1017
    %v1456 = vpack.c.b16 %v1024, %v1018
    %v1457 = vpack.c.b16 %v1025, %v1019
    %v1458 = vpack.c.b16 %v1026, %v1020
    %v1459 = vpack.c.b16 %v1033, %v1027
    %v1460 = vpack.c.b16 %v1034, %v1028
    %v1461 = vpack.c.b16 %v1035, %v1029
    %v1462 = vpack.c.b16 %v1036, %v1030
    %v1463 = vpack.c.b16 %v1037, %v1031
    %v1464 = vpack.c.b16 %v1038, %v1032
    %v1465 = vpack.c.b16 %v1045, %v1039
    %v1466 = vpack.c.b16 %v1046, %v1040
    %v1467 = vpack.c.b16 %v1047, %v1041
    %v1468 = vpack.c.b16 %v1048, %v1042
    %v1469 = vpack.c.b16 %v1049, %v1043
    %v1470 = vpack.c.b16 %v1050, %v1044
    %v1471 = vpack.c.b16 %v1057, %v1051
    %v1472 = vpack.c.b16 %v1058, %v1052
    %v1473 = vpack.c.b16 %v1059, %v1053
    %v1474 = vpack.c.b16 %v1060, %v1054
    %v1475 = vpack.c.b16 %v1061, %v1055
    %v1476 = vpack.c.b16 %v1062, %v1056
    %v1477 = vpack.c.b16 %v1069, %v1063
    %v1478 = vpack.c.b16 %v1070, %v1064
    %v1479 = vpack.c.b16 %v1071, %v1065
    %v1480 = vpack.c.b16 %v1072, %v1066
    %v1481 = vpack.c.b16 %v1073, %v1067
    %v1482 = vpack.c.b16 %v1074, %v1068
    %v1483 = vpack.c.b16 %v1081, %v1075
    %v1484 = vpack.c.b16 %v1082, %v1076
    %v1485 = vpack.c.b16 %v1083, %v1077
    %v1486 = vpack.c.b16 %v1084, %v1078
    %v1487 = vpack.c.b16 %v1085, %v1079
    %v1488 = vpack.c.b16 %v1086, %v1080
    %v1489 = vpack.c.b16 %v1093, %v1087
    %v1490 = vpack.c.b16 %v1094, %v1088
    %v1491 = vpack.c.b16 %v1095, %v1089
    %v1492 = vpack.c.b16 %v1096, %v1090
    %v1493 = vpack.c.b16 %v1097, %v1091
    %v1494 = vpack.c.b16 %v1098, %v1092
    %v1495 = vpack.c.b16 %v1105, %v1099
    %v1496 = vpack.c.b16 %v1106, %v1100
    %v1497 = vpack.c.b16 %v1107, %v1101
    %v1498 = vpack.c.b16 %v1108, %v1102
    %v1499 = vpack.c.b16 %v1109, %v1103
    %v1500 = vpack.c.b16 %v1110, %v1104
    %v1501 = vpack.c.b16 %v1117, %v1111
    %v1502 = vpack.c.b16 %v1118, %v1112
    %v1503 = vpack.c.b16 %v1119, %v1113
    %v1504 = vpack.c.b16 %v1120, %v1114
    %v1505 = vpack.c.b16 %v1121, %v1115
    %v1506 = vpack.c.b16 %v1122, %v1116
    %v1507 = vpack.c.b16 %v1129, %v1123
    %v1508 = vpack.c.b16 %v1130, %v1124
    %v1509 = vpack.c.b16 %v1131, %v1125
    %v1510 = vpack.c.b16 %v1132, %v1126
    %v1511 = vpack.c.b16 %v1133, %v1127
    %v1512 = vpack.c.b16 %v1134, %v1128
    %v1513 = vpack.c.b16 %v1141, %v1135
    %v1514 = vpack.c.b16 %v1142, %v1136
    %v1515 = vpack.c.b16 %v1143, %v1137
    %v1516 = vpack.c.b16 %v1144, %v1138
    %v1517 = vpack.c.b16 %v1145, %v1139
    %v1518 = vpack.c.b16 %v1146, %v1140
    %v1519 = vpack.c.b16 %v1153, %v1147
    %v1520 = vpack.c.b16 %v1154, %v1148
    %v1521 = vpack.c.b16 %v1155, %v1149
    %v1522 = vpack.c.b16 %v1156, %v1150
    %v1523 = vpack.c.b16 %v1157, %v1151
    %v1524 = vpack.c.b16 %v1158, %v1152
    %v1525 = vpack.c.b16 %v1165, %v1159
    %v1526 = vpack.c.b16 %v1166, %v1160
    %v1527 = vpack.c.b16 %v1167, %v1161
    %v1528 = vpack.c.b16 %v1168, %v1162
    %v1529 = vpack.c.b16 %v1169, %v1163
    %v1530 = vpack.c.b16 %v1170, %v1164
    %v1531 = vpack.c.b16 %v1177, %v1171
    %v1532 = vpack.c.b16 %v1178, %v1172
    %v1533 = vpack.c.b16 %v1179, %v1173
    %v1534 = vpack.c.b16 %v1180, %v1174
    %v1535 = vpack.c.b16 %v1181, %v1175
    %v1536 = vpack.c.b16 %v1182, %v1176
    %v1537 = vpack.c.b16 %v1189, %v1183
    %v1538 = vpack.c.b16 %v1190, %v1184
    %v1539 = vpack.c.b16 %v1191, %v1185
    %v1540 = vpack.c.b16 %v1192, %v1186
    %v1541 = vpack.c.b16 %v1193, %v1187
    %v1542 = vpack.c.b16 %v1194, %v1188
    %v1543 = vpack.c.b16 %v1201, %v1195
    %v1544 = vpack.c.b16 %v1202, %v1196
    %v1545 = vpack.c.b16 %v1203, %v1197
    %v1546 = vpack.c.b16 %v1204, %v1198
    %v1547 = vpack.c.b16 %v1205, %v1199
    %v1548 = vpack.c.b16 %v1206, %v1200
    %v1549 = vpack.c.b16 %v1213, %v1207
    %v1550 = vpack.c.b16 %v1214, %v1208
    %v1551 = vpack.c.b16 %v1215, %v1209
    %v1552 = vpack.c.b16 %v1216, %v1210
    %v1553 = vpack.c.b16 %v1217, %v1211
    %v1554 = vpack.c.b16 %v1218, %v1212
    %v1555 = vpack.c.b16 %v1225, %v1219
    %v1556 = vpack.c.b16 %v1226, %v1220
    %v1557 = vpack.c.b16 %v1227, %v1221
    %v1558 = vpack.c.b16 %v1228, %v1222
    %v1559 = vpack.c.b16 %v1229, %v1223
    %v1560 = vpack.c.b16 %v1230, %v1224
    %v1561 = vpack.c.b16 %v1237, %v1231
    %v1562 = vpack.c.b16 %v1238, %v1232
    %v1563 = vpack.c.b16 %v1239, %v1233
    %v1564 = vpack.c.b16 %v1240, %v1234
    %v1565 = vpack.c.b16 %v1241, %v1235
    %v1566 = vpack.c.b16 %v1242, %v1236
    %v1567 = vpack.c.b16 %v1249, %v1243
    %v1568 = vpack.c.b16 %v1250, %v1244
    %v1569 = vpack.c.b16 %v1251, %v1245
    %v1570 = vpack.c.b16 %v1252, %v1246
    %v1571 = vpack.c.b16 %v1253, %v1247
    %v1572 = vpack.c.b16 %v1254, %v1248
    %v1573 = vpack.c.b16 %v1261, %v1255
    %v1574 = vpack.c.b16 %v1262, %v1256
    %v1575 = vpack.c.b16 %v1263, %v1257
    %v1576 = vpack.c.b16 %v1264, %v1258
    %v1577 = vpack.c.b16 %v1265, %v1259
    %v1578 = vpack.c.b16 %v1266, %v1260
    %v1579 = vpack.c.b16 %v1273, %v1267
    %v1580 = vpack.c.b16 %v1274, %v1268
    %v1581 = vpack.c.b16 %v1275, %v1269
    %v1582 = vpack.c.b16 %v1276, %v1270
    %v1583 = vpack.c.b16 %v1277, %v1271
    %v1584 = vpack.c.b16 %v1278, %v1272
    %v1585 = vpack.c.b16 %v1285, %v1279
    %v1586 = vpack.c.b16 %v1286, %v1280
    %v1587 = vpack.c.b16 %v1287, %v1281
    %v1588 = vpack.c.b16 %v1288, %v1282
    %v1589 = vpack.c.b16 %v1289, %v1283
    %v1590 = vpack.c.b16 %v1290, %v1284
    %v1591 = vpack.c.b16 %v1297, %v1291
    %v1592 = vpack.c.b16 %v1298, %v1292
    %v1593 = vpack.c.b16 %v1299, %v1293
    %v1594 = vpack.c.b16 %v1300, %v1294
    %v1595 = vpack.c.b16 %v1301, %v1295
    %v1596 = vpack.c.b16 %v1302, %v1296
    %v1597 = vpack.c.b16 %v1309, %v1303
    %v1598 = vpack.c.b16 %v1310, %v1304
    %v1599 = vpack.c.b16 %v1311, %v1305
    %v1600 = vpack.c.b16 %v1312, %v1306
    %v1601 = vpack.c.b16 %v1313, %v1307
    %v1602 = vpack.c.b16 %v1314, %v1308
    %1891 = vmatprep.subr.bf16.mxu0 %v1316
    %1892 = vmatpush1.bf16.msra.mxu0 %v1315
    %1893 = vmatprep.subr.bf16.mxu0 %v1322
    %1894 = vmatpush1.bf16.msra.mxu0 %v1321
    %1895 = vmatprep.subr.bf16.mxu0 %v1328
    %1896 = vmatpush1.bf16.msra.mxu0 %v1327
    %1897 = vmatprep.subr.bf16.mxu0 %v1334
    %1898 = vmatpush1.bf16.msra.mxu0 %v1333
    %1899 = vmatprep.subr.bf16.mxu0 %v1340
    %1900 = vmatpush1.bf16.msra.mxu0 %v1339
    %1901 = vmatprep.subr.bf16.mxu0 %v1346
    %1902 = vmatpush1.bf16.msra.mxu0 %v1345
    %1903 = vmatprep.subr.bf16.mxu0 %v1352
    %1904 = vmatpush1.bf16.msra.mxu0 %v1351
    %1905 = vmatprep.subr.bf16.mxu0 %v1358
    %1906 = vmatpush1.bf16.msra.mxu0 %v1357
    %1907 = vmatprep.subr.bf16.mxu0 %v1364
    %1908 = vmatpush1.bf16.msra.mxu0 %v1363
    %1909 = vmatprep.subr.bf16.mxu0 %v1370
    %1910 = vmatpush1.bf16.msra.mxu0 %v1369
    %1911 = vmatprep.subr.bf16.mxu0 %v1376
    %1912 = vmatpush1.bf16.msra.mxu0 %v1375
    %1913 = vmatprep.subr.bf16.mxu0 %v1382
    %1914 = vmatpush1.bf16.msra.mxu0 %v1381
    %1915 = vmatprep.subr.bf16.mxu0 %v1388
    %1916 = vmatpush1.bf16.msra.mxu0 %v1387
    %1917 = vmatprep.subr.bf16.mxu0 %v1394
    %1918 = vmatpush1.bf16.msra.mxu0 %v1393
    %1919 = vmatprep.subr.bf16.mxu0 %v1400
    %1920 = vmatpush1.bf16.msra.mxu0 %v1399
    %1921 = vmatprep.subr.bf16.mxu0 %v1406
    %1922 = vmatpush1.bf16.msra.mxu0 %v1405
    %1923 = vmatprep.mubr.bf16.mxu0 %v158
    %1924 = vmatmul.mubr.bf16.gmra.mrb[0].mxu0 %v157
    %v1925 = vpop.f32.mrb[0].mxu0
    %v1926 = vadd.f32 0.0, %v1925
    %v1927 = vpop.f32.mrb[0].mxu0
    %v1928 = vadd.f32 0.0, %v1927
    %v1929 = vpop.f32.mrb[0].mxu0
    %v1930 = vpop.f32.mrb[0].mxu0
    %1931 = vdwg.mxu0
    %1932 = vmatprep.subr.bf16.mxu0 %v1412
    %1933 = vmatpush1.bf16.msra.mxu0 %v1411
    %1934 = vmatprep.subr.bf16.mxu0 %v1418
    %1935 = vmatpush1.bf16.msra.mxu0 %v1417
    %1936 = vmatprep.subr.bf16.mxu0 %v1424
    %1937 = vmatpush1.bf16.msra.mxu0 %v1423
    %1938 = vmatprep.subr.bf16.mxu0 %v1430
    %1939 = vmatpush1.bf16.msra.mxu0 %v1429
    %1940 = vmatprep.subr.bf16.mxu0 %v1436
    %1941 = vmatpush1.bf16.msra.mxu0 %v1435
    %1942 = vmatprep.subr.bf16.mxu0 %v1442
    %1943 = vmatpush1.bf16.msra.mxu0 %v1441
    %1944 = vmatprep.subr.bf16.mxu0 %v1448
    %1945 = vmatpush1.bf16.msra.mxu0 %v1447
    %1946 = vmatprep.subr.bf16.mxu0 %v1454
    %1947 = vmatpush1.bf16.msra.mxu0 %v1453
    %1948 = vmatprep.subr.bf16.mxu0 %v1460
    %1949 = vmatpush1.bf16.msra.mxu0 %v1459
    %1950 = vmatprep.subr.bf16.mxu0 %v1466
    %1951 = vmatpush1.bf16.msra.mxu0 %v1465
    %1952 = vmatprep.subr.bf16.mxu0 %v1472
    %1953 = vmatpush1.bf16.msra.mxu0 %v1471
    %1954 = vmatprep.subr.bf16.mxu0 %v1478
    %1955 = vmatpush1.bf16.msra.mxu0 %v1477
    %1956 = vmatprep.subr.bf16.mxu0 %v1484
    %1957 = vmatpush1.bf16.msra.mxu0 %v1483
    %1958 = vmatprep.subr.bf16.mxu0 %v1490
    %1959 = vmatpush1.bf16.msra.mxu0 %v1489
    %1960 = vmatprep.subr.bf16.mxu0 %v1496
    %1961 = vmatpush1.bf16.msra.mxu0 %v1495
    %1962 = vmatprep.subr.bf16.mxu0 %v1502
    %1963 = vmatpush1.bf16.msra.mxu0 %v1501
    %1964 = vmatprep.mubr.bf16.mxu0 %v160
    %1965 = vmatmul.mubr.bf16.gmra.mrb[0].mxu0 %v159
    %v1966 = vpop.f32.mrb[0].mxu0
    %v1967 = vadd.f32 %v1926, %v1966
    %v1968 = vpop.f32.mrb[0].mxu0
    %v1969 = vadd.f32 %v1928, %v1968
    %v1970 = vpop.f32.mrb[0].mxu0
    %v1971 = vpop.f32.mrb[0].mxu0
    %1972 = vdwg.mxu0
    %1973 = vmatprep.subr.bf16.mxu0 %v1508
    %1974 = vmatpush1.bf16.msra.mxu0 %v1507
    %1975 = vmatprep.subr.bf16.mxu0 %v1514
    %1976 = vmatpush1.bf16.msra.mxu0 %v1513
    %1977 = vmatprep.subr.bf16.mxu0 %v1520
    %1978 = vmatpush1.bf16.msra.mxu0 %v1519
    %1979 = vmatprep.subr.bf16.mxu0 %v1526
    %1980 = vmatpush1.bf16.msra.mxu0 %v1525
    %1981 = vmatprep.subr.bf16.mxu0 %v1532
    %1982 = vmatpush1.bf16.msra.mxu0 %v1531
    %1983 = vmatprep.subr.bf16.mxu0 %v1538
    %1984 = vmatpush1.bf16.msra.mxu0 %v1537
    %1985 = vmatprep.subr.bf16.mxu0 %v1544
    %1986 = vmatpush1.bf16.msra.mxu0 %v1543
    %1987 = vmatprep.subr.bf16.mxu0 %v1550
    %1988 = vmatpush1.bf16.msra.mxu0 %v1549
    %1989 = vmatprep.subr.bf16.mxu0 %v1556
    %1990 = vmatpush1.bf16.msra.mxu0 %v1555
    %1991 = vmatprep.subr.bf16.mxu0 %v1562
    %1992 = vmatpush1.bf16.msra.mxu0 %v1561
    %1993 = vmatprep.subr.bf16.mxu0 %v1568
    %1994 = vmatpush1.bf16.msra.mxu0 %v1567
    %1995 = vmatprep.subr.bf16.mxu0 %v1574
    %1996 = vmatpush1.bf16.msra.mxu0 %v1573
    %1997 = vmatprep.subr.bf16.mxu0 %v1580
    %1998 = vmatpush1.bf16.msra.mxu0 %v1579
    %1999 = vmatprep.subr.bf16.mxu0 %v1586
    %2000 = vmatpush1.bf16.msra.mxu0 %v1585
    %2001 = vmatprep.subr.bf16.mxu0 %v1592
    %2002 = vmatpush1.bf16.msra.mxu0 %v1591
    %2003 = vmatprep.subr.bf16.mxu0 %v1598
    %2004 = vmatpush1.bf16.msra.mxu0 %v1597
    %2005 = vmatprep.mubr.bf16.mxu0 %v162
    %2006 = vmatmul.mubr.bf16.gmra.mrb[0].mxu0 %v161
    %v2007 = vpop.f32.mrb[0].mxu0
    %v2008 = vadd.f32 %v1967, %v2007
    %v2009 = vpop.f32.mrb[0].mxu0
    %v2010 = vadd.f32 %v1969, %v2009
    %v2011 = vpop.f32.mrb[0].mxu0
    %v2012 = vpop.f32.mrb[0].mxu0
    %2013 = vdwg.mxu0
    %2014 = vmatprep.subr.bf16.mxu0 %v1318
    %2015 = vmatpush1.bf16.msra.mxu0 %v1317
    %2016 = vmatprep.subr.bf16.mxu0 %v1324
    %2017 = vmatpush1.bf16.msra.mxu0 %v1323
    %2018 = vmatprep.subr.bf16.mxu0 %v1330
    %2019 = vmatpush1.bf16.msra.mxu0 %v1329
    %2020 = vmatprep.subr.bf16.mxu0 %v1336
    %2021 = vmatpush1.bf16.msra.mxu0 %v1335
    %2022 = vmatprep.subr.bf16.mxu0 %v1342
    %2023 = vmatpush1.bf16.msra.mxu0 %v1341
    %2024 = vmatprep.subr.bf16.mxu0 %v1348
    %2025 = vmatpush1.bf16.msra.mxu0 %v1347
    %2026 = vmatprep.subr.bf16.mxu0 %v1354
    %2027 = vmatpush1.bf16.msra.mxu0 %v1353
    %2028 = vmatprep.subr.bf16.mxu0 %v1360
    %2029 = vmatpush1.bf16.msra.mxu0 %v1359
    %2030 = vmatprep.subr.bf16.mxu0 %v1366
    %2031 = vmatpush1.bf16.msra.mxu0 %v1365
    %2032 = vmatprep.subr.bf16.mxu0 %v1372
    %2033 = vmatpush1.bf16.msra.mxu0 %v1371
    %2034 = vmatprep.subr.bf16.mxu0 %v1378
    %2035 = vmatpush1.bf16.msra.mxu0 %v1377
    %2036 = vmatprep.subr.bf16.mxu0 %v1384
    %2037 = vmatpush1.bf16.msra.mxu0 %v1383
    %2038 = vmatprep.subr.bf16.mxu0 %v1390
    %2039 = vmatpush1.bf16.msra.mxu0 %v1389
    %2040 = vmatprep.subr.bf16.mxu0 %v1396
    %2041 = vmatpush1.bf16.msra.mxu0 %v1395
    %2042 = vmatprep.subr.bf16.mxu0 %v1402
    %2043 = vmatpush1.bf16.msra.mxu0 %v1401
    %2044 = vmatprep.subr.bf16.mxu0 %v1408
    %2045 = vmatpush1.bf16.msra.mxu0 %v1407
    %2046 = vmatprep.mubr.bf16.mxu0 %v158
    %2047 = vmatmul.mubr.bf16.gmra.mrb[0].mxu0 %v157
    %v2048 = vpop.f32.mrb[0].mxu0
    %v2049 = vadd.f32 0.0, %v2048
    %v2050 = vpop.f32.mrb[0].mxu0
    %v2051 = vadd.f32 0.0, %v2050
    %v2052 = vpop.f32.mrb[0].mxu0
    %v2053 = vpop.f32.mrb[0].mxu0
    %2054 = vdwg.mxu0
    %2055 = vmatprep.subr.bf16.mxu0 %v1414
    %2056 = vmatpush1.bf16.msra.mxu0 %v1413
    %2057 = vmatprep.subr.bf16.mxu0 %v1420
    %2058 = vmatpush1.bf16.msra.mxu0 %v1419
    %2059 = vmatprep.subr.bf16.mxu0 %v1426
    %2060 = vmatpush1.bf16.msra.mxu0 %v1425
    %2061 = vmatprep.subr.bf16.mxu0 %v1432
    %2062 = vmatpush1.bf16.msra.mxu0 %v1431
    %2063 = vmatprep.subr.bf16.mxu0 %v1438
    %2064 = vmatpush1.bf16.msra.mxu0 %v1437
    %2065 = vmatprep.subr.bf16.mxu0 %v1444
    %2066 = vmatpush1.bf16.msra.mxu0 %v1443
    %2067 = vmatprep.subr.bf16.mxu0 %v1450
    %2068 = vmatpush1.bf16.msra.mxu0 %v1449
    %2069 = vmatprep.subr.bf16.mxu0 %v1456
    %2070 = vmatpush1.bf16.msra.mxu0 %v1455
    %2071 = vmatprep.subr.bf16.mxu0 %v1462
    %2072 = vmatpush1.bf16.msra.mxu0 %v1461
    %2073 = vmatprep.subr.bf16.mxu0 %v1468
    %2074 = vmatpush1.bf16.msra.mxu0 %v1467
    %2075 = vmatprep.subr.bf16.mxu0 %v1474
    %2076 = vmatpush1.bf16.msra.mxu0 %v1473
    %2077 = vmatprep.subr.bf16.mxu0 %v1480
    %2078 = vmatpush1.bf16.msra.mxu0 %v1479
    %2079 = vmatprep.subr.bf16.mxu0 %v1486
    %2080 = vmatpush1.bf16.msra.mxu0 %v1485
    %2081 = vmatprep.subr.bf16.mxu0 %v1492
    %2082 = vmatpush1.bf16.msra.mxu0 %v1491
    %2083 = vmatprep.subr.bf16.mxu0 %v1498
    %2084 = vmatpush1.bf16.msra.mxu0 %v1497
    %2085 = vmatprep.subr.bf16.mxu0 %v1504
    %2086 = vmatpush1.bf16.msra.mxu0 %v1503
    %2087 = vmatprep.mubr.bf16.mxu0 %v160
    %2088 = vmatmul.mubr.bf16.gmra.mrb[0].mxu0 %v159
    %v2089 = vpop.f32.mrb[0].mxu0
    %v2090 = vadd.f32 %v2049, %v2089
    %v2091 = vpop.f32.mrb[0].mxu0
    %v2092 = vadd.f32 %v2051, %v2091
    %v2093 = vpop.f32.mrb[0].mxu0
    %v2094 = vpop.f32.mrb[0].mxu0
    %2095 = vdwg.mxu0
    %2096 = vmatprep.subr.bf16.mxu0 %v1510
    %2097 = vmatpush1.bf16.msra.mxu0 %v1509
    %2098 = vmatprep.subr.bf16.mxu0 %v1516
    %2099 = vmatpush1.bf16.msra.mxu0 %v1515
    %2100 = vmatprep.subr.bf16.mxu0 %v1522
    %2101 = vmatpush1.bf16.msra.mxu0 %v1521
    %2102 = vmatprep.subr.bf16.mxu0 %v1528
    %2103 = vmatpush1.bf16.msra.mxu0 %v1527
    %2104 = vmatprep.subr.bf16.mxu0 %v1534
    %2105 = vmatpush1.bf16.msra.mxu0 %v1533
    %2106 = vmatprep.subr.bf16.mxu0 %v1540
    %2107 = vmatpush1.bf16.msra.mxu0 %v1539
    %2108 = vmatprep.subr.bf16.mxu0 %v1546
    %2109 = vmatpush1.bf16.msra.mxu0 %v1545
    %2110 = vmatprep.subr.bf16.mxu0 %v1552
    %2111 = vmatpush1.bf16.msra.mxu0 %v1551
    %2112 = vmatprep.subr.bf16.mxu0 %v1558
    %2113 = vmatpush1.bf16.msra.mxu0 %v1557
    %2114 = vmatprep.subr.bf16.mxu0 %v1564
    %2115 = vmatpush1.bf16.msra.mxu0 %v1563
    %2116 = vmatprep.subr.bf16.mxu0 %v1570
    %2117 = vmatpush1.bf16.msra.mxu0 %v1569
    %2118 = vmatprep.subr.bf16.mxu0 %v1576
    %2119 = vmatpush1.bf16.msra.mxu0 %v1575
    %2120 = vmatprep.subr.bf16.mxu0 %v1582
    %2121 = vmatpush1.bf16.msra.mxu0 %v1581
    %2122 = vmatprep.subr.bf16.mxu0 %v1588
    %2123 = vmatpush1.bf16.msra.mxu0 %v1587
    %2124 = vmatprep.subr.bf16.mxu0 %v1594
    %2125 = vmatpush1.bf16.msra.mxu0 %v1593
    %2126 = vmatprep.subr.bf16.mxu0 %v1600
    %2127 = vmatpush1.bf16.msra.mxu0 %v1599
    %2128 = vmatprep.mubr.bf16.mxu0 %v162
    %2129 = vmatmul.mubr.bf16.gmra.mrb[0].mxu0 %v161
    %v2130 = vpop.f32.mrb[0].mxu0
    %v2131 = vadd.f32 %v2090, %v2130
    %v2132 = vpop.f32.mrb[0].mxu0
    %v2133 = vadd.f32 %v2092, %v2132
    %v2134 = vpop.f32.mrb[0].mxu0
    %v2135 = vpop.f32.mrb[0].mxu0
    %2136 = vdwg.mxu0
    %2137 = vmatprep.subr.bf16.mxu0 %v1320
    %2138 = vmatpush1.bf16.msra.mxu0 %v1319
    %2139 = vmatprep.subr.bf16.mxu0 %v1326
    %2140 = vmatpush1.bf16.msra.mxu0 %v1325
    %2141 = vmatprep.subr.bf16.mxu0 %v1332
    %2142 = vmatpush1.bf16.msra.mxu0 %v1331
    %2143 = vmatprep.subr.bf16.mxu0 %v1338
    %2144 = vmatpush1.bf16.msra.mxu0 %v1337
    %2145 = vmatprep.subr.bf16.mxu0 %v1344
    %2146 = vmatpush1.bf16.msra.mxu0 %v1343
    %2147 = vmatprep.subr.bf16.mxu0 %v1350
    %2148 = vmatpush1.bf16.msra.mxu0 %v1349
    %2149 = vmatprep.subr.bf16.mxu0 %v1356
    %2150 = vmatpush1.bf16.msra.mxu0 %v1355
    %2151 = vmatprep.subr.bf16.mxu0 %v1362
    %2152 = vmatpush1.bf16.msra.mxu0 %v1361
    %2153 = vmatprep.subr.bf16.mxu0 %v1368
    %2154 = vmatpush1.bf16.msra.mxu0 %v1367
    %2155 = vmatprep.subr.bf16.mxu0 %v1374
    %2156 = vmatpush1.bf16.msra.mxu0 %v1373
    %2157 = vmatprep.subr.bf16.mxu0 %v1380
    %2158 = vmatpush1.bf16.msra.mxu0 %v1379
    %2159 = vmatprep.subr.bf16.mxu0 %v1386
    %2160 = vmatpush1.bf16.msra.mxu0 %v1385
    %2161 = vmatprep.subr.bf16.mxu0 %v1392
    %2162 = vmatpush1.bf16.msra.mxu0 %v1391
    %2163 = vmatprep.subr.bf16.mxu0 %v1398
    %2164 = vmatpush1.bf16.msra.mxu0 %v1397
    %2165 = vmatprep.subr.bf16.mxu0 %v1404
    %2166 = vmatpush1.bf16.msra.mxu0 %v1403
    %2167 = vmatprep.subr.bf16.mxu0 %v1410
    %2168 = vmatpush1.bf16.msra.mxu0 %v1409
    %2169 = vmatprep.mubr.bf16.mxu0 %v158
    %2170 = vmatmul.mubr.bf16.gmra.mrb[0].mxu0 %v157
    %v2171 = vpop.f32.mrb[0].mxu0
    %v2172 = vadd.f32 0.0, %v2171
    %v2173 = vpop.f32.mrb[0].mxu0
    %v2174 = vadd.f32 0.0, %v2173
    %v2175 = vpop.f32.mrb[0].mxu0
    %v2176 = vpop.f32.mrb[0].mxu0
    %2177 = vdwg.mxu0
    %2178 = vmatprep.subr.bf16.mxu0 %v1416
    %2179 = vmatpush1.bf16.msra.mxu0 %v1415
    %2180 = vmatprep.subr.bf16.mxu0 %v1422
    %2181 = vmatpush1.bf16.msra.mxu0 %v1421
    %2182 = vmatprep.subr.bf16.mxu0 %v1428
    %2183 = vmatpush1.bf16.msra.mxu0 %v1427
    %2184 = vmatprep.subr.bf16.mxu0 %v1434
    %2185 = vmatpush1.bf16.msra.mxu0 %v1433
    %2186 = vmatprep.subr.bf16.mxu0 %v1440
    %2187 = vmatpush1.bf16.msra.mxu0 %v1439
    %2188 = vmatprep.subr.bf16.mxu0 %v1446
    %2189 = vmatpush1.bf16.msra.mxu0 %v1445
    %2190 = vmatprep.subr.bf16.mxu0 %v1452
    %2191 = vmatpush1.bf16.msra.mxu0 %v1451
    %2192 = vmatprep.subr.bf16.mxu0 %v1458
    %2193 = vmatpush1.bf16.msra.mxu0 %v1457
    %2194 = vmatprep.subr.bf16.mxu0 %v1464
    %2195 = vmatpush1.bf16.msra.mxu0 %v1463
    %2196 = vmatprep.subr.bf16.mxu0 %v1470
    %2197 = vmatpush1.bf16.msra.mxu0 %v1469
    %2198 = vmatprep.subr.bf16.mxu0 %v1476
    %2199 = vmatpush1.bf16.msra.mxu0 %v1475
    %2200 = vmatprep.subr.bf16.mxu0 %v1482
    %2201 = vmatpush1.bf16.msra.mxu0 %v1481
    %2202 = vmatprep.subr.bf16.mxu0 %v1488
    %2203 = vmatpush1.bf16.msra.mxu0 %v1487
    %2204 = vmatprep.subr.bf16.mxu0 %v1494
    %2205 = vmatpush1.bf16.msra.mxu0 %v1493
    %2206 = vmatprep.subr.bf16.mxu0 %v1500
    %2207 = vmatpush1.bf16.msra.mxu0 %v1499
    %2208 = vmatprep.subr.bf16.mxu0 %v1506
    %2209 = vmatpush1.bf16.msra.mxu0 %v1505
    %2210 = vmatprep.mubr.bf16.mxu0 %v160
    %2211 = vmatmul.mubr.bf16.gmra.mrb[0].mxu0 %v159
    %v2212 = vpop.f32.mrb[0].mxu0
    %v2213 = vadd.f32 %v2172, %v2212
    %v2214 = vpop.f32.mrb[0].mxu0
    %v2215 = vadd.f32 %v2174, %v2214
    %v2216 = vpop.f32.mrb[0].mxu0
    %v2217 = vpop.f32.mrb[0].mxu0
    %2218 = vdwg.mxu0
    %2219 = vmatprep.subr.bf16.mxu0 %v1512
    %2220 = vmatpush1.bf16.msra.mxu0 %v1511
    %2221 = vmatprep.subr.bf16.mxu0 %v1518
    %2222 = vmatpush1.bf16.msra.mxu0 %v1517
    %2223 = vmatprep.subr.bf16.mxu0 %v1524
    %2224 = vmatpush1.bf16.msra.mxu0 %v1523
    %2225 = vmatprep.subr.bf16.mxu0 %v1530
    %2226 = vmatpush1.bf16.msra.mxu0 %v1529
    %2227 = vmatprep.subr.bf16.mxu0 %v1536
    %2228 = vmatpush1.bf16.msra.mxu0 %v1535
    %2229 = vmatprep.subr.bf16.mxu0 %v1542
    %2230 = vmatpush1.bf16.msra.mxu0 %v1541
    %2231 = vmatprep.subr.bf16.mxu0 %v1548
    %2232 = vmatpush1.bf16.msra.mxu0 %v1547
    %2233 = vmatprep.subr.bf16.mxu0 %v1554
    %2234 = vmatpush1.bf16.msra.mxu0 %v1553
    %2235 = vmatprep.subr.bf16.mxu0 %v1560
    %2236 = vmatpush1.bf16.msra.mxu0 %v1559
    %2237 = vmatprep.subr.bf16.mxu0 %v1566
    %2238 = vmatpush1.bf16.msra.mxu0 %v1565
    %2239 = vmatprep.subr.bf16.mxu0 %v1572
    %2240 = vmatpush1.bf16.msra.mxu0 %v1571
    %2241 = vmatprep.subr.bf16.mxu0 %v1578
    %2242 = vmatpush1.bf16.msra.mxu0 %v1577
    %2243 = vmatprep.subr.bf16.mxu0 %v1584
    %2244 = vmatpush1.bf16.msra.mxu0 %v1583
    %2245 = vmatprep.subr.bf16.mxu0 %v1590
    %2246 = vmatpush1.bf16.msra.mxu0 %v1589
    %2247 = vmatprep.subr.bf16.mxu0 %v1596
    %2248 = vmatpush1.bf16.msra.mxu0 %v1595
    %2249 = vmatprep.subr.bf16.mxu0 %v1602
    %2250 = vmatpush1.bf16.msra.mxu0 %v1601
    %2251 = vmatprep.mubr.bf16.mxu0 %v162
    %2252 = vmatmul.mubr.bf16.gmra.mrb[0].mxu0 %v161
    %v2253 = vpop.f32.mrb[0].mxu0
    %v2254 = vadd.f32 %v2213, %v2253
    %v2255 = vpop.f32.mrb[0].mxu0
    %v2256 = vadd.f32 %v2215, %v2255
    %v2257 = vpop.f32.mrb[0].mxu0
    %v2258 = vpop.f32.mrb[0].mxu0
    %2259 = vdwg.mxu0
    %v2260 = vmax.f32 %v2008, 0.0
    %v2261 = vmax.f32 %v2010, 0.0
    %v2262 = vmax.f32 %v2131, 0.0
    %v2263 = vmax.f32 %v2133, 0.0
    %v2264 = vmax.f32 %v2254, 0.0
    %v2265 = vmax.f32 %v2256, 0.0
    %v2266 = vpack.c.bf16 %v2260, %v2260
    %v2267 = vpack.c.bf16 %v2261, %v2261
    %v2268 = vpack.c.bf16 %v2262, %v2262
    %v2269 = vpack.c.bf16 %v2263, %v2263
    %v2270 = vpack.c.bf16 %v2264, %v2264
    %v2271 = vpack.c.bf16 %v2265, %v2265
    %v2272 = vld [vmem:[#allocation8] sm:$0xf]
    %v2273 = vld [vmem:[#allocation8 + $0x4] sm:$0xf]
    %v2274 = vld [vmem:[#allocation8 + $0x8] sm:$0xf]
    %v2275 = vld [vmem:[#allocation8 + $0xc] sm:$0xf]
    %v2276 = vld [vmem:[#allocation8 + $0x10] sm:$0xf]
    %v2277 = vld [vmem:[#allocation8 + $0x14] sm:$0xf]
    %v2278 = vld [vmem:[#allocation8 + $0x18] sm:$0xf]
    %v2279 = vld [vmem:[#allocation8 + $0x1c] sm:$0xf]
    %v2280 = vld [vmem:[#allocation8 + $0x20] sm:$0xf]
    %v2281 = vld [vmem:[#allocation8 + $0x24] sm:$0xf]
    %v2282 = vld [vmem:[#allocation8 + $0x28] sm:$0xf]
    %v2283 = vld [vmem:[#allocation8 + $0x2c] sm:$0xf]
    %v2284 = vld [vmem:[#allocation8 + $0x30] sm:$0xf]
    %v2285 = vld [vmem:[#allocation8 + $0x34] sm:$0xf]
    %v2286 = vld [vmem:[#allocation8 + $0x38] sm:$0xf]
    %v2287 = vld [vmem:[#allocation8 + $0x3c] sm:$0xf]
    %v2288 = vld [vmem:[#allocation8 + $0x40] sm:$0xf]
    %v2289 = vld [vmem:[#allocation8 + $0x44] sm:$0xf]
    %v2290 = vld [vmem:[#allocation8 + $0x48] sm:$0xf]
    %v2291 = vld [vmem:[#allocation8 + $0x4c] sm:$0xf]
    %v2292 = vld [vmem:[#allocation8 + $0x50] sm:$0xf]
    %v2293 = vld [vmem:[#allocation8 + $0x54] sm:$0xf]
    %v2294 = vld [vmem:[#allocation8 + $0x58] sm:$0xf]
    %v2295 = vld [vmem:[#allocation8 + $0x5c] sm:$0xf]
    %v2296 = vld [vmem:[#allocation8 + $0x60] sm:$0xf]
    %v2297 = vld [vmem:[#allocation8 + $0x64] sm:$0xf]
    %v2298 = vld [vmem:[#allocation8 + $0x68] sm:$0xf]
    %v2299 = vld [vmem:[#allocation8 + $0x6c] sm:$0xf]
    %v2300 = vld [vmem:[#allocation8 + $0x70] sm:$0xf]
    %v2301 = vld [vmem:[#allocation8 + $0x74] sm:$0xf]
    %v2302 = vld [vmem:[#allocation8 + $0x78] sm:$0xf]
    %v2303 = vld [vmem:[#allocation8 + $0x7c] sm:$0xf]
    %v2304 = vld [vmem:[#allocation8 + $0x80] sm:$0xf]
    %v2305 = vld [vmem:[#allocation8 + $0x84] sm:$0xf]
    %v2306 = vld [vmem:[#allocation8 + $0x88] sm:$0xf]
    %v2307 = vld [vmem:[#allocation8 + $0x8c] sm:$0xf]
    %v2308 = vld [vmem:[#allocation8 + $0x90] sm:$0xf]
    %v2309 = vld [vmem:[#allocation8 + $0x94] sm:$0xf]
    %v2310 = vld [vmem:[#allocation8 + $0x98] sm:$0xf]
    %v2311 = vld [vmem:[#allocation8 + $0x9c] sm:$0xf]
    %v2312 = vld [vmem:[#allocation8 + $0xa0] sm:$0xf]
    %v2313 = vld [vmem:[#allocation8 + $0xa4] sm:$0xf]
    %v2314 = vld [vmem:[#allocation8 + $0xa8] sm:$0xf]
    %v2315 = vld [vmem:[#allocation8 + $0xac] sm:$0xf]
    %v2316 = vld [vmem:[#allocation8 + $0xb0] sm:$0xf]
    %v2317 = vld [vmem:[#allocation8 + $0xb4] sm:$0xf]
    %v2318 = vld [vmem:[#allocation8 + $0xb8] sm:$0xf]
    %v2319 = vld [vmem:[#allocation8 + $0xbc] sm:$0xf]
    %v2320 = vld [vmem:[#allocation8 + $0xc0] sm:$0xf]
    %v2321 = vld [vmem:[#allocation8 + $0xc4] sm:$0xf]
    %v2322 = vld [vmem:[#allocation8 + $0xc8] sm:$0xf]
    %v2323 = vld [vmem:[#allocation8 + $0xcc] sm:$0xf]
    %v2324 = vld [vmem:[#allocation8 + $0xd0] sm:$0xf]
    %v2325 = vld [vmem:[#allocation8 + $0xd4] sm:$0xf]
    %v2326 = vld [vmem:[#allocation8 + $0xd8] sm:$0xf]
    %v2327 = vld [vmem:[#allocation8 + $0xdc] sm:$0xf]
    %v2328 = vld [vmem:[#allocation8 + $0xe0] sm:$0xf]
    %v2329 = vld [vmem:[#allocation8 + $0xe4] sm:$0xf]
    %v2330 = vld [vmem:[#allocation8 + $0xe8] sm:$0xf]
    %v2331 = vld [vmem:[#allocation8 + $0xec] sm:$0xf]
    %v2332 = vld [vmem:[#allocation8 + $0xf0] sm:$0xf]
    %v2333 = vld [vmem:[#allocation8 + $0xf4] sm:$0xf]
    %v2334 = vld [vmem:[#allocation8 + $0xf8] sm:$0xf]
    %v2335 = vld [vmem:[#allocation8 + $0xfc] sm:$0xf]
    %v2336 = vld [vmem:[#allocation8 + $0x100] sm:$0xf]
    %v2337 = vld [vmem:[#allocation8 + $0x104] sm:$0xf]
    %v2338 = vld [vmem:[#allocation8 + $0x108] sm:$0xf]
    %v2339 = vld [vmem:[#allocation8 + $0x10c] sm:$0xf]
    %v2340 = vld [vmem:[#allocation8 + $0x110] sm:$0xf]
    %v2341 = vld [vmem:[#allocation8 + $0x114] sm:$0xf]
    %v2342 = vld [vmem:[#allocation8 + $0x118] sm:$0xf]
    %v2343 = vld [vmem:[#allocation8 + $0x11c] sm:$0xf]
    %v2344 = vld [vmem:[#allocation8 + $0x120] sm:$0xf]
    %v2345 = vld [vmem:[#allocation8 + $0x124] sm:$0xf]
    %v2346 = vld [vmem:[#allocation8 + $0x128] sm:$0xf]
    %v2347 = vld [vmem:[#allocation8 + $0x12c] sm:$0xf]
    %v2348 = vld [vmem:[#allocation8 + $0x130] sm:$0xf]
    %v2349 = vld [vmem:[#allocation8 + $0x134] sm:$0xf]
    %v2350 = vld [vmem:[#allocation8 + $0x138] sm:$0xf]
    %v2351 = vld [vmem:[#allocation8 + $0x13c] sm:$0xf]
    %v2352 = vld [vmem:[#allocation8 + $0x140] sm:$0xf]
    %v2353 = vld [vmem:[#allocation8 + $0x144] sm:$0xf]
    %v2354 = vld [vmem:[#allocation8 + $0x148] sm:$0xf]
    %v2355 = vld [vmem:[#allocation8 + $0x14c] sm:$0xf]
    %v2356 = vld [vmem:[#allocation8 + $0x150] sm:$0xf]
    %v2357 = vld [vmem:[#allocation8 + $0x154] sm:$0xf]
    %v2358 = vld [vmem:[#allocation8 + $0x158] sm:$0xf]
    %v2359 = vld [vmem:[#allocation8 + $0x15c] sm:$0xf]
    %v2360 = vld [vmem:[#allocation8 + $0x160] sm:$0xf]
    %v2361 = vld [vmem:[#allocation8 + $0x164] sm:$0xf]
    %v2362 = vld [vmem:[#allocation8 + $0x168] sm:$0xf]
    %v2363 = vld [vmem:[#allocation8 + $0x16c] sm:$0xf]
    %v2364 = vld [vmem:[#allocation8 + $0x170] sm:$0xf]
    %v2365 = vld [vmem:[#allocation8 + $0x174] sm:$0xf]
    %v2366 = vld [vmem:[#allocation8 + $0x178] sm:$0xf]
    %v2367 = vld [vmem:[#allocation8 + $0x17c] sm:$0xf]
    %v2368 = vld [vmem:[#allocation10] sm:$0x1]
    %v2370 = vlaneseq
    %v2371 = vshrl.u32 %v2370, 7
    %v2372 = vsub.s32 0, %v2371
    %v2373 = vrot.slane %v2368, %v2372
    %v2471 = vunpack.c.l.b16 %v2272
    %v2472 = vunpack.c.l.b16 %v2273
    %v2473 = vunpack.c.l.b16 %v2274
    %v2474 = vunpack.c.l.b16 %v2275
    %v2475 = vunpack.c.l.b16 %v2276
    %v2476 = vunpack.c.l.b16 %v2277
    %v2477 = vunpack.c.l.b16 %v2278
    %v2478 = vunpack.c.l.b16 %v2279
    %v2479 = vunpack.c.l.b16 %v2280
    %v2480 = vunpack.c.l.b16 %v2281
    %v2481 = vunpack.c.l.b16 %v2282
    %v2482 = vunpack.c.l.b16 %v2283
    %v2483 = vunpack.c.l.b16 %v2284
    %v2484 = vunpack.c.l.b16 %v2285
    %v2485 = vunpack.c.l.b16 %v2286
    %v2486 = vunpack.c.l.b16 %v2287
    %v2487 = vunpack.c.l.b16 %v2288
    %v2488 = vunpack.c.l.b16 %v2289
    %v2489 = vunpack.c.l.b16 %v2290
    %v2490 = vunpack.c.l.b16 %v2291
    %v2491 = vunpack.c.l.b16 %v2292
    %v2492 = vunpack.c.l.b16 %v2293
    %v2493 = vunpack.c.l.b16 %v2294
    %v2494 = vunpack.c.l.b16 %v2295
    %v2495 = vunpack.c.l.b16 %v2296
    %v2496 = vunpack.c.l.b16 %v2297
    %v2497 = vunpack.c.l.b16 %v2298
    %v2498 = vunpack.c.l.b16 %v2299
    %v2499 = vunpack.c.l.b16 %v2300
    %v2500 = vunpack.c.l.b16 %v2301
    %v2501 = vunpack.c.l.b16 %v2302
    %v2502 = vunpack.c.l.b16 %v2303
    %v2503 = vunpack.c.l.b16 %v2304
    %v2504 = vunpack.c.l.b16 %v2305
    %v2505 = vunpack.c.l.b16 %v2306
    %v2506 = vunpack.c.l.b16 %v2307
    %v2507 = vunpack.c.l.b16 %v2308
    %v2508 = vunpack.c.l.b16 %v2309
    %v2509 = vunpack.c.l.b16 %v2310
    %v2510 = vunpack.c.l.b16 %v2311
    %v2511 = vunpack.c.l.b16 %v2312
    %v2512 = vunpack.c.l.b16 %v2313
    %v2513 = vunpack.c.l.b16 %v2314
    %v2514 = vunpack.c.l.b16 %v2315
    %v2515 = vunpack.c.l.b16 %v2316
    %v2516 = vunpack.c.l.b16 %v2317
    %v2517 = vunpack.c.l.b16 %v2318
    %v2518 = vunpack.c.l.b16 %v2319
    %v2519 = vunpack.c.l.b16 %v2320
    %v2520 = vunpack.c.l.b16 %v2321
    %v2521 = vunpack.c.l.b16 %v2322
    %v2522 = vunpack.c.l.b16 %v2323
    %v2523 = vunpack.c.l.b16 %v2324
    %v2524 = vunpack.c.l.b16 %v2325
    %v2525 = vunpack.c.l.b16 %v2326
    %v2526 = vunpack.c.l.b16 %v2327
    %v2527 = vunpack.c.l.b16 %v2328
    %v2528 = vunpack.c.l.b16 %v2329
    %v2529 = vunpack.c.l.b16 %v2330
    %v2530 = vunpack.c.l.b16 %v2331
    %v2531 = vunpack.c.l.b16 %v2332
    %v2532 = vunpack.c.l.b16 %v2333
    %v2533 = vunpack.c.l.b16 %v2334
    %v2534 = vunpack.c.l.b16 %v2335
    %v2535 = vunpack.c.l.b16 %v2336
    %v2536 = vunpack.c.l.b16 %v2337
    %v2537 = vunpack.c.l.b16 %v2338
    %v2538 = vunpack.c.l.b16 %v2339
    %v2539 = vunpack.c.l.b16 %v2340
    %v2540 = vunpack.c.l.b16 %v2341
    %v2541 = vunpack.c.l.b16 %v2342
    %v2542 = vunpack.c.l.b16 %v2343
    %v2543 = vunpack.c.l.b16 %v2344
    %v2544 = vunpack.c.l.b16 %v2345
    %v2545 = vunpack.c.l.b16 %v2346
    %v2546 = vunpack.c.l.b16 %v2347
    %v2547 = vunpack.c.l.b16 %v2348
    %v2548 = vunpack.c.l.b16 %v2349
    %v2549 = vunpack.c.l.b16 %v2350
    %v2550 = vunpack.c.l.b16 %v2351
    %v2551 = vunpack.c.l.b16 %v2352
    %v2552 = vunpack.c.l.b16 %v2353
    %v2553 = vunpack.c.l.b16 %v2354
    %v2554 = vunpack.c.l.b16 %v2355
    %v2555 = vunpack.c.l.b16 %v2356
    %v2556 = vunpack.c.l.b16 %v2357
    %v2557 = vunpack.c.l.b16 %v2358
    %v2558 = vunpack.c.l.b16 %v2359
    %v2559 = vunpack.c.l.b16 %v2360
    %v2560 = vunpack.c.l.b16 %v2361
    %v2561 = vunpack.c.l.b16 %v2362
    %v2562 = vunpack.c.l.b16 %v2363
    %v2563 = vunpack.c.l.b16 %v2364
    %v2564 = vunpack.c.l.b16 %v2365
    %v2565 = vunpack.c.l.b16 %v2366
    %v2566 = vunpack.c.l.b16 %v2367
    %v2567 = vpack.c.b16 %v2472, %v2471
    %v2568 = vpack.c.b16 %v2474, %v2473
    %v2569 = vpack.c.b16 %v2476, %v2475
    %v2570 = vpack.c.b16 %v2478, %v2477
    %v2571 = vpack.c.b16 %v2480, %v2479
    %v2572 = vpack.c.b16 %v2482, %v2481
    %v2573 = vpack.c.b16 %v2484, %v2483
    %v2574 = vpack.c.b16 %v2486, %v2485
    %v2575 = vpack.c.b16 %v2488, %v2487
    %v2576 = vpack.c.b16 %v2490, %v2489
    %v2577 = vpack.c.b16 %v2492, %v2491
    %v2578 = vpack.c.b16 %v2494, %v2493
    %v2579 = vpack.c.b16 %v2496, %v2495
    %v2580 = vpack.c.b16 %v2498, %v2497
    %v2581 = vpack.c.b16 %v2500, %v2499
    %v2582 = vpack.c.b16 %v2502, %v2501
    %v2583 = vpack.c.b16 %v2504, %v2503
    %v2584 = vpack.c.b16 %v2506, %v2505
    %v2585 = vpack.c.b16 %v2508, %v2507
    %v2586 = vpack.c.b16 %v2510, %v2509
    %v2587 = vpack.c.b16 %v2512, %v2511
    %v2588 = vpack.c.b16 %v2514, %v2513
    %v2589 = vpack.c.b16 %v2516, %v2515
    %v2590 = vpack.c.b16 %v2518, %v2517
    %v2591 = vpack.c.b16 %v2520, %v2519
    %v2592 = vpack.c.b16 %v2522, %v2521
    %v2593 = vpack.c.b16 %v2524, %v2523
    %v2594 = vpack.c.b16 %v2526, %v2525
    %v2595 = vpack.c.b16 %v2528, %v2527
    %v2596 = vpack.c.b16 %v2530, %v2529
    %v2597 = vpack.c.b16 %v2532, %v2531
    %v2598 = vpack.c.b16 %v2534, %v2533
    %v2599 = vpack.c.b16 %v2536, %v2535
    %v2600 = vpack.c.b16 %v2538, %v2537
    %v2601 = vpack.c.b16 %v2540, %v2539
    %v2602 = vpack.c.b16 %v2542, %v2541
    %v2603 = vpack.c.b16 %v2544, %v2543
    %v2604 = vpack.c.b16 %v2546, %v2545
    %v2605 = vpack.c.b16 %v2548, %v2547
    %v2606 = vpack.c.b16 %v2550, %v2549
    %v2607 = vpack.c.b16 %v2552, %v2551
    %v2608 = vpack.c.b16 %v2554, %v2553
    %v2609 = vpack.c.b16 %v2556, %v2555
    %v2610 = vpack.c.b16 %v2558, %v2557
    %v2611 = vpack.c.b16 %v2560, %v2559
    %v2612 = vpack.c.b16 %v2562, %v2561
    %v2613 = vpack.c.b16 %v2564, %v2563
    %v2614 = vpack.c.b16 %v2566, %v2565
    %2663 = vmatprep.subr.bf16.mxu0 0
    %2664 = vmatpush1.bf16.msra.mxu0 %v2567
    %2665 = vmatprep.subr.bf16.mxu0 0
    %2666 = vmatpush1.bf16.msra.mxu0 %v2568
    %2667 = vmatprep.subr.bf16.mxu0 0
    %2668 = vmatpush1.bf16.msra.mxu0 %v2569
    %2669 = vmatprep.subr.bf16.mxu0 0
    %2670 = vmatpush1.bf16.msra.mxu0 %v2570
    %2671 = vmatprep.subr.bf16.mxu0 0
    %2672 = vmatpush1.bf16.msra.mxu0 %v2571
    %2673 = vmatprep.subr.bf16.mxu0 0
    %2674 = vmatpush1.bf16.msra.mxu0 %v2572
    %2675 = vmatprep.subr.bf16.mxu0 0
    %2676 = vmatpush1.bf16.msra.mxu0 %v2573
    %2677 = vmatprep.subr.bf16.mxu0 0
    %2678 = vmatpush1.bf16.msra.mxu0 %v2574
    %2679 = vmatprep.subr.bf16.mxu0 0
    %2680 = vmatpush1.bf16.msra.mxu0 %v2575
    %2681 = vmatprep.subr.bf16.mxu0 0
    %2682 = vmatpush1.bf16.msra.mxu0 %v2576
    %2683 = vmatprep.subr.bf16.mxu0 0
    %2684 = vmatpush1.bf16.msra.mxu0 %v2577
    %2685 = vmatprep.subr.bf16.mxu0 0
    %2686 = vmatpush1.bf16.msra.mxu0 %v2578
    %2687 = vmatprep.subr.bf16.mxu0 0
    %2688 = vmatpush1.bf16.msra.mxu0 %v2579
    %2689 = vmatprep.subr.bf16.mxu0 0
    %2690 = vmatpush1.bf16.msra.mxu0 %v2580
    %2691 = vmatprep.subr.bf16.mxu0 0
    %2692 = vmatpush1.bf16.msra.mxu0 %v2581
    %2693 = vmatprep.subr.bf16.mxu0 0
    %2694 = vmatpush1.bf16.msra.mxu0 %v2582
    %2695 = vmatprep.mubr.bf16.mxu0 %v2267
    %2696 = vmatmul.mubr.bf16.gmra.mrb[0].mxu0 %v2266
    %v2697 = vpop.f32.mrb[0].mxu0
    %v2698 = vadd.f32 %v2373, %v2697
    %v2699 = vpop.f32.mrb[0].mxu0
    %v2700 = vpop.f32.mrb[0].mxu0
    %v2701 = vpop.f32.mrb[0].mxu0
    %2702 = vdwg.mxu0
    %2703 = vmatprep.subr.bf16.mxu0 0
    %2704 = vmatpush1.bf16.msra.mxu0 %v2583
    %2705 = vmatprep.subr.bf16.mxu0 0
    %2706 = vmatpush1.bf16.msra.mxu0 %v2584
    %2707 = vmatprep.subr.bf16.mxu0 0
    %2708 = vmatpush1.bf16.msra.mxu0 %v2585
    %2709 = vmatprep.subr.bf16.mxu0 0
    %2710 = vmatpush1.bf16.msra.mxu0 %v2586
    %2711 = vmatprep.subr.bf16.mxu0 0
    %2712 = vmatpush1.bf16.msra.mxu0 %v2587
    %2713 = vmatprep.subr.bf16.mxu0 0
    %2714 = vmatpush1.bf16.msra.mxu0 %v2588
    %2715 = vmatprep.subr.bf16.mxu0 0
    %2716 = vmatpush1.bf16.msra.mxu0 %v2589
    %2717 = vmatprep.subr.bf16.mxu0 0
    %2718 = vmatpush1.bf16.msra.mxu0 %v2590
    %2719 = vmatprep.subr.bf16.mxu0 0
    %2720 = vmatpush1.bf16.msra.mxu0 %v2591
    %2721 = vmatprep.subr.bf16.mxu0 0
    %2722 = vmatpush1.bf16.msra.mxu0 %v2592
    %2723 = vmatprep.subr.bf16.mxu0 0
    %2724 = vmatpush1.bf16.msra.mxu0 %v2593
    %2725 = vmatprep.subr.bf16.mxu0 0
    %2726 = vmatpush1.bf16.msra.mxu0 %v2594
    %2727 = vmatprep.subr.bf16.mxu0 0
    %2728 = vmatpush1.bf16.msra.mxu0 %v2595
    %2729 = vmatprep.subr.bf16.mxu0 0
    %2730 = vmatpush1.bf16.msra.mxu0 %v2596
    %2731 = vmatprep.subr.bf16.mxu0 0
    %2732 = vmatpush1.bf16.msra.mxu0 %v2597
    %2733 = vmatprep.subr.bf16.mxu0 0
    %2734 = vmatpush1.bf16.msra.mxu0 %v2598
    %2735 = vmatprep.mubr.bf16.mxu0 %v2269
    %2736 = vmatmul.mubr.bf16.gmra.mrb[0].mxu0 %v2268
    %v2737 = vpop.f32.mrb[0].mxu0
    %v2738 = vadd.f32 %v2698, %v2737
    %v2739 = vpop.f32.mrb[0].mxu0
    %v2740 = vpop.f32.mrb[0].mxu0
    %v2741 = vpop.f32.mrb[0].mxu0
    %2742 = vdwg.mxu0
    %2743 = vmatprep.subr.bf16.mxu0 0
    %2744 = vmatpush1.bf16.msra.mxu0 %v2599
    %2745 = vmatprep.subr.bf16.mxu0 0
    %2746 = vmatpush1.bf16.msra.mxu0 %v2600
    %2747 = vmatprep.subr.bf16.mxu0 0
    %2748 = vmatpush1.bf16.msra.mxu0 %v2601
    %2749 = vmatprep.subr.bf16.mxu0 0
    %2750 = vmatpush1.bf16.msra.mxu0 %v2602
    %2751 = vmatprep.subr.bf16.mxu0 0
    %2752 = vmatpush1.bf16.msra.mxu0 %v2603
    %2753 = vmatprep.subr.bf16.mxu0 0
    %2754 = vmatpush1.bf16.msra.mxu0 %v2604
    %2755 = vmatprep.subr.bf16.mxu0 0
    %2756 = vmatpush1.bf16.msra.mxu0 %v2605
    %2757 = vmatprep.subr.bf16.mxu0 0
    %2758 = vmatpush1.bf16.msra.mxu0 %v2606
    %2759 = vmatprep.subr.bf16.mxu0 0
    %2760 = vmatpush1.bf16.msra.mxu0 %v2607
    %2761 = vmatprep.subr.bf16.mxu0 0
    %2762 = vmatpush1.bf16.msra.mxu0 %v2608
    %2763 = vmatprep.subr.bf16.mxu0 0
    %2764 = vmatpush1.bf16.msra.mxu0 %v2609
    %2765 = vmatprep.subr.bf16.mxu0 0
    %2766 = vmatpush1.bf16.msra.mxu0 %v2610
    %2767 = vmatprep.subr.bf16.mxu0 0
    %2768 = vmatpush1.bf16.msra.mxu0 %v2611
    %2769 = vmatprep.subr.bf16.mxu0 0
    %2770 = vmatpush1.bf16.msra.mxu0 %v2612
    %2771 = vmatprep.subr.bf16.mxu0 0
    %2772 = vmatpush1.bf16.msra.mxu0 %v2613
    %2773 = vmatprep.subr.bf16.mxu0 0
    %2774 = vmatpush1.bf16.msra.mxu0 %v2614
    %2775 = vmatprep.mubr.bf16.mxu0 %v2271
    %2776 = vmatmul.mubr.bf16.gmra.mrb[0].mxu0 %v2270
    %v2777 = vpop.f32.mrb[0].mxu0
    %v2778 = vadd.f32 %v2738, %v2777
    %v2779 = vpop.f32.mrb[0].mxu0
    %v2780 = vpop.f32.mrb[0].mxu0
    %v2781 = vpop.f32.mrb[0].mxu0
    %2782 = vdwg.mxu0
    %2783 = vst [vmem:[#allocation11] sm:$0xff] %v2778
    // Predicated region
    $region42: #{tpu_custom_call.1} parent=1 // pred_check
      _
    $region43: #{tpu_custom_call.1} parent=1 // pred_check_branch
      %2785 = sbr.rel (0) target = $region45
    $region44: #{tpu_custom_call.1} parent=1 // pred_region
      %s2787 = ssub.s32 128, 128
      %2788 = vsyncadd [#allocation4], %s2787
      %s2790 = sshll.u32 [#allocation11], 4
      %s2791 = int_to_ptr.vmem [resolvable:$true] %s2790
      %2793 = dma.vmem_to_hbm [thread:$0]  %s2791, 128, %s5, [#allocation4]
    $region45: #{tpu_custom_call.1} parent=1 // pred_fallthru
      _
    // Predicated region
    $region46: #{tpu_custom_call.1} parent=1 // pred_check
      _
    $region47: #{tpu_custom_call.1} parent=1 // pred_check_branch
      %2795 = sbr.rel (0) target = $region49
    $region48: #{tpu_custom_call.1} parent=1 // pred_region
      %2796 = dma.done [#allocation4], 128
    $region49: #{tpu_custom_call.1} parent=1 // pred_fallthru
      _
    %2797 = vsyncpa [#allocation3], 1
    %2798 = vsyncpa [#allocation6], 1
    %2799 = vsyncpa [#allocation9], 1
    %2800 = vsyncpa [#allocation4], 1

</llo_original>
